<compile_context>
chip_gen: v7x
topology: tpu7x:2x2x1
jax: 0.10.0
libtpu: 0.0.40
codegen_flags: <defaults>
</compile_context>

<pallas_src>
import functools

import jax
import jax.numpy as jnp
from jax import lax
from jax.experimental import pallas as pl
from jax.experimental.pallas import tpu as pltpu

EPS = 1e-12          # torch.nn.functional.normalize default eps
EPS2 = EPS * EPS     # x / max(||x||, eps) == x * rsqrt(max(x.x, eps^2))

# Explicit scoped-VMEM ceiling (v7x has 64 MiB physical; actual usage of
# these kernels is only a few MiB).
VMEM_LIMIT = 64 * 1024 * 1024


def _pick_tile(dim, preferred):
    """Largest preferred tile that evenly divides `dim`, else the full dim.

    # TODO(synk): for large dims not divisible by any preferred tile this
    # falls back to the full dimension; pad/mask the last tile instead if such
    # shapes ever show up (v7x only has 64 MiB physical VMEM).
    """
    for cand in preferred:
        if cand <= dim and dim % cand == 0:
            return cand
    return dim


# ----------------------------- tiled matmul kernel ---------------------------

def _matmul_kernel(x_ref, w_ref, o_ref, acc_ref):
    @pl.when(pl.program_id(2) == 0)
    def _():
        acc_ref[...] = jnp.zeros(acc_ref.shape, acc_ref.dtype)

    acc_ref[...] += jnp.dot(x_ref[...], w_ref[...],
                            preferred_element_type=jnp.float32)

    @pl.when(pl.program_id(2) == pl.num_programs(2) - 1)
    def _():
        o_ref[...] = acc_ref[...].astype(o_ref.dtype)


def pallas_matmul(x, w, *, compute_dtype, out_dtype):
    """(M, K) @ (K, N) -> (M, N) with f32 MXU accumulation.

    Operands are fed to the MXU in `compute_dtype` (bf16 on the perf path).
    512-preferred tiles keep the mem-bound projections near the HBM roofline
    and the full K is contracted in one shot when the working set is small
    (no accumulator revisits).
    """
    M, K = x.shape
    K2, N = w.shape
    assert K == K2
    itemsize = jnp.dtype(compute_dtype).itemsize
    bm = _pick_tile(M, (512, 256, 128))
    bn = _pick_tile(N, (512, 256, 128))
    if K * (bm + bn) * itemsize * 2 <= 8 * 1024 * 1024:
        bk = K                                   # single-shot contraction
    else:
        bk = _pick_tile(K, (512, 256, 128))
    grid = (M // bm, N // bn, K // bk)
    cost = pl.CostEstimate(
        flops=int(2 * M * N * K), transcendentals=0,
        bytes_accessed=int(itemsize * (M * K + K * N)
                           + jnp.dtype(out_dtype).itemsize * M * N))
    return pl.pallas_call(
        _matmul_kernel,
        out_shape=jax.ShapeDtypeStruct((M, N), out_dtype),
        grid=grid,
        in_specs=[
            pl.BlockSpec((bm, bk), lambda i, j, k: (i, k)),
            pl.BlockSpec((bk, bn), lambda i, j, k: (k, j)),
        ],
        out_specs=pl.BlockSpec((bm, bn), lambda i, j, k: (i, j)),
        scratch_shapes=[pltpu.VMEM((bm, bn), jnp.float32)],
        compiler_params=pltpu.CompilerParams(
            dimension_semantics=("parallel", "parallel", "arbitrary"),
            vmem_limit_bytes=VMEM_LIMIT),
        cost_estimate=cost,
    )(x.astype(compute_dtype), w.astype(compute_dtype))


# ------------------------- flash attention kernel ----------------------------

def _l2norm_scale_heads(t, scale_row, hpg, dh):
    """Per-head l2norm over contiguous Dh lane groups fused with the learned
    per-head scale.  t: (rows, hpg*dh) f32, scale_row: (1, hpg*dh) f32."""
    parts = []
    for h in range(hpg):
        cs = slice(h * dh, (h + 1) * dh)
        th = t[:, cs]
        inv = lax.rsqrt(jnp.maximum(                      # rsqrt -> EUP slot
            jnp.sum(th * th, axis=-1, keepdims=True), EPS2))
        parts.append(th * inv)
    tn = parts[0] if hpg == 1 else jnp.concatenate(parts, axis=-1)
    return tn * scale_row


def _flash_attn_kernel(q_ref, k_ref, v_ref, qs_ref, ks_ref, o_ref,
                       qn_ref, m_ref, l_ref, acc_ref,
                       *, hpg, dim_head, compute_dtype):
    ki = pl.program_id(3)

    @pl.when(ki == 0)
    def _():
        m_ref[...] = jnp.full(m_ref.shape, -jnp.inf, m_ref.dtype)
        l_ref[...] = jnp.zeros(l_ref.shape, l_ref.dtype)
        acc_ref[...] = jnp.zeros(acc_ref.shape, acc_ref.dtype)
        # q is normalized/scaled once per q block and reused across every kv
        # block (hoisted out of the kv loop).
        qn_ref[...] = _l2norm_scale_heads(
            q_ref[0].astype(jnp.float32), qs_ref[...], hpg, dim_head
        ).astype(qn_ref.dtype)

    # k normalization for this kv block (recomputed per q block; cheap VPU/EUP
    # work that overlaps the MXU).
    kn = _l2norm_scale_heads(
        k_ref[0].astype(jnp.float32), ks_ref[...], hpg, dim_head
    ).astype(compute_dtype)
    v = v_ref[0]                    # (tk, gw) compute dtype
    qn = qn_ref[...]                # (tq, gw) compute dtype

    pv_parts, alpha_parts = [], []
    for h in range(hpg):            # hpg = 128 // dim_head (== 2 for Dh = 64)
        cs = slice(h * dim_head, (h + 1) * dim_head)
        # q @ k^T as an NT contraction (no in-kernel transpose), scale = 1.0.
        s = lax.dot_general(qn[:, cs], kn[:, cs],
                            dimension_numbers=(((1,), (1,)), ((), ())),
                            preferred_element_type=jnp.float32)     # (tq, tk)
        m_prev = m_ref[h]                                           # (tq, 1)
        l_prev = l_ref[h]
        m_new = jnp.maximum(m_prev, jnp.max(s, axis=-1, keepdims=True))
        alpha = jnp.exp(m_prev - m_new)
        p = jnp.exp(s - m_new)
        m_ref[h] = m_new                       # full-slab writes, no lane mask
        l_ref[h] = alpha * l_prev + jnp.sum(p, axis=-1, keepdims=True)
        pv_parts.append(jnp.dot(p.astype(compute_dtype), v[:, cs],
                                preferred_element_type=jnp.float32))  # (tq, Dh)
        alpha_parts.append(jnp.broadcast_to(alpha, (alpha.shape[0], dim_head)))

    pv = pv_parts[0] if hpg == 1 else jnp.concatenate(pv_parts, axis=-1)
    rescale = alpha_parts[0] if hpg == 1 else jnp.concatenate(alpha_parts, axis=-1)
    # Single full-lane-width accumulator update per kv step.
    acc_ref[...] = rescale * acc_ref[...] + pv

    @pl.when(ki == pl.num_programs(3) - 1)
    def _():
        # Exact reciprocal (runs once per output tile; approx=True caused the
        # previous mismatch), applied as one whole-width multiply, then a
        # single lane-dense merged-head store.
        inv_parts = [jnp.broadcast_to(1.0 / l_ref[h],
                                      (acc_ref.shape[0], dim_head))
                     for h in range(hpg)]
        inv = inv_parts[0] if hpg == 1 else jnp.concatenate(inv_parts, axis=-1)
        o_ref[0] = (acc_ref[...] * inv).astype(o_ref.dtype)


def pallas_flash_attention(qkv, q_scale_cols, k_scale_cols, *,
                           heads, dim_head, compute_dtype):
    """qkv: (B, N, 3*d_model); scales: (1, d_model) -> (B, N, d_model)."""
    B, N, three_dm = qkv.shape
    d_model = heads * dim_head
    assert three_dm == 3 * d_model

    # Head grouping: q/k/v are fetched as lane-dense blocks of `gw` columns
    # (128 lanes when possible) so DMA tiles are unpadded and per-head slices
    # in the kernel are contiguous lane slices.
    if d_model % 128 == 0 and 128 % dim_head == 0 and d_model > 128:
        gw = 128
    else:
        gw = d_model
    hpg = gw // dim_head             # heads handled per grid cell
    n_groups = d_model // gw

    tq = _pick_tile(N, (256, 128))
    tk = _pick_tile(N, (256, 128))
    grid = (B, n_groups, N // tq, N // tk)

    q_spec = pl.BlockSpec((1, tq, gw), lambda b, g, qi, ki: (b, qi, g))
    k_spec = pl.BlockSpec((1, tk, gw), lambda b, g, qi, ki: (b, ki, n_groups + g))
    v_spec = pl.BlockSpec((1, tk, gw), lambda b, g, qi, ki: (b, ki, 2 * n_groups + g))
    s_spec = pl.BlockSpec((1, gw), lambda b, g, qi, ki: (0, g))
    o_spec = pl.BlockSpec((1, tq, gw), lambda b, g, qi, ki: (b, qi, g))

    itemsize = jnp.dtype(compute_dtype).itemsize
    cost = pl.CostEstimate(
        flops=int(4 * B * heads * N * N * dim_head),
        transcendentals=int(B * heads * N * N),
        bytes_accessed=int(itemsize * B * d_model * (2 * N + 2 * N * (N // tq))))

    kernel = functools.partial(_flash_attn_kernel, hpg=hpg,
                               dim_head=dim_head, compute_dtype=compute_dtype)

    return pl.pallas_call(
        kernel,
        out_shape=jax.ShapeDtypeStruct((B, N, d_model), compute_dtype),
        grid=grid,
        in_specs=[q_spec, k_spec, v_spec, s_spec, s_spec],
        out_specs=o_spec,
        scratch_shapes=[
            pltpu.VMEM((tq, gw), compute_dtype),      # normalized + scaled q
            pltpu.VMEM((hpg, tq, 1), jnp.float32),    # running max m (per head)
            pltpu.VMEM((hpg, tq, 1), jnp.float32),    # running sum l (per head)
            pltpu.VMEM((tq, gw), jnp.float32),        # output accumulator
        ],
        compiler_params=pltpu.CompilerParams(
            dimension_semantics=("parallel", "parallel", "parallel", "arbitrary"),
            vmem_limit_bytes=VMEM_LIMIT),
        cost_estimate=cost,
    )(qkv, qkv, qkv, q_scale_cols, k_scale_cols)


# ------------------------------ module forward -------------------------------

def _l2norm(t, axis=-1):
    return t / jnp.maximum(
        jnp.sqrt(jnp.sum(t * t, axis=axis, keepdims=True)), EPS)


def init_attention_params(key, dim, dim_head, heads):
    dim_inner = dim_head * heads
    kq, kk, kv, ko = jax.random.split(key, 4)
    scale = 0.02
    return {
        # PyTorch nn.Linear weight layout: (out_features, in_features)
        "Wq": jax.random.normal(kq, (dim_inner, dim), jnp.float32) * scale,
        "Wk": jax.random.normal(kk, (dim_inner, dim), jnp.float32) * scale,
        "Wv": jax.random.normal(kv, (dim_inner, dim), jnp.float32) * scale,
        "Wout": jax.random.normal(ko, (dim, dim_inner), jnp.float32) * scale,
        "q_scale": jnp.ones((heads, 1, dim_head), jnp.float32) * dim_head ** 0.25,
        "k_scale": jnp.ones((heads, 1, dim_head), jnp.float32) * dim_head ** 0.25,
    }


def attention_forward(x, params, *, heads, dim_head,
                      compute_dtype=jnp.bfloat16):
    """x: (B, N, dim) f32 -> (B, N, dim) f32.  Eval mode (dropout = 0)."""
    B, N, dim = x.shape
    dim_inner = heads * dim_head

    # NormLinear weight parametrization (L2 normalization) — parameter glue.
    wq_n = _l2norm(params["Wq"], axis=-1)   # norm over input dim
    wk_n = _l2norm(params["Wk"], axis=-1)
    wv_n = _l2norm(params["Wv"], axis=-1)
    wo_n = _l2norm(params["Wout"], axis=0)  # norm_dim_in=False -> dim 0

    # Fused q/k/v projection: x is read from HBM once, one wide tiled matmul;
    # the qkv tensor travels through HBM in `compute_dtype` (bf16 perf path).
    w_qkv = jnp.concatenate([wq_n.T, wk_n.T, wv_n.T], axis=1)  # (dim, 3*dim_inner)
    qkv2d = pallas_matmul(x.reshape(B * N, dim), w_qkv,
                          compute_dtype=compute_dtype, out_dtype=compute_dtype)
    # Flat layout: columns ordered (q|k|v, head, dh); pure reshape, no transpose.
    qkv = qkv2d.reshape(B, N, 3 * dim_inner)

    out = pallas_flash_attention(
        qkv,
        params["q_scale"].reshape(1, dim_inner).astype(jnp.float32),
        params["k_scale"].reshape(1, dim_inner).astype(jnp.float32),
        heads=heads, dim_head=dim_head,
        compute_dtype=compute_dtype)                           # (B, N, H*Dh)

    # Output projection; attention already produced the merged-head layout.
    y2d = pallas_matmul(out.reshape(B * N, dim_inner), wo_n.T,
                        compute_dtype=compute_dtype, out_dtype=jnp.float32)
    return y2d.reshape(B, N, dim)
    # TODO(synk): training-mode attention dropout not implemented (eval only).


# ------------------------------ pure-JAX reference ---------------------------

def attention_reference(x, params, *, heads, dim_head):
    B, N, dim = x.shape
    wq_n = _l2norm(params["Wq"], axis=-1)
    wk_n = _l2norm(params["Wk"], axis=-1)
    wv_n = _l2norm(params["Wv"], axis=-1)
    wo_n = _l2norm(params["Wout"], axis=0)

    hp = lax.Precision.HIGHEST
    q = jnp.einsum("bnd,od->bno", x, wq_n, precision=hp)
    k = jnp.einsum("bnd,od->bno", x, wk_n, precision=hp)
    v = jnp.einsum("bnd,od->bno", x, wv_n, precision=hp)

    def sh(t):
        return t.reshape(B, N, heads, dim_head).transpose(0, 2, 1, 3)

    q, k, v = sh(q), sh(k), sh(v)
    q = _l2norm(q) * params["q_scale"]
    k = _l2norm(k) * params["k_scale"]
    s = jnp.einsum("bhqd,bhkd->bhqk", q, k, precision=hp)     # scale = 1.0
    p = jax.nn.softmax(s, axis=-1)
    o = jnp.einsum("bhqk,bhkd->bhqd", p, v, precision=hp)
    o = o.transpose(0, 2, 1, 3).reshape(B, N, heads * dim_head)
    return jnp.einsum("bni,oi->bno", o, wo_n, precision=hp)


# ----------------------------------- main -------------------------------------

if __name__ == "__main__":
    # Lane-aligned but still small: d_model = 4 * 64 = 256 (two 128-lane head
    # groups), N = 512 so the online-softmax multi-kv-block path is exercised.
    batch, seq, dim = 2, 512, 128
    heads, dim_head = 4, 64

    key = jax.random.PRNGKey(0)
    kp, kx = jax.random.split(key)
    params = init_attention_params(kp, dim, dim_head, heads)
    x = jax.random.normal(kx, (batch, seq, dim), jnp.float32)

    y_ref = attention_reference(x, params, heads=heads, dim_head=dim_head)

    # 1) fp32 parity path: proves the kernels compute the same function as the
    #    PyTorch module (tolerance absorbs TPU f32-matmul rounding).
    y_f32 = attention_forward(x, params, heads=heads, dim_head=dim_head,
                              compute_dtype=jnp.float32)
    y_f32 = jax.block_until_ready(y_f32)
    assert y_f32.shape == (batch, seq, dim)
    assert jnp.allclose(y_f32, y_ref, atol=2e-3, rtol=2e-3), (
        "fp32 Pallas output does not match JAX reference")

    # 2) bf16 performance path (MXU-native inputs, f32 accumulation): checked
    #    against the f32 reference at a bf16-appropriate bound.
    y_bf16 = attention_forward(x, params, heads=heads, dim_head=dim_head,
                               compute_dtype=jnp.bfloat16)
    y_bf16 = jax.block_until_ready(y_bf16)
    max_err = float(jnp.max(jnp.abs(y_bf16 - y_ref)))
    ref_scale = float(jnp.max(jnp.abs(y_ref)))
    assert max_err <= 0.08 * ref_scale + 1e-3, (
        f"bf16 Pallas output too far from reference: {max_err} vs scale {ref_scale}")

    print("KERNEL_OK")
</pallas_src>

<mosaic_0001>
module attributes {stable_mosaic.version = 11 : i64} {
  func.func @_matmul_kernel(%arg0: i32, %arg1: i32, %arg2: i32, %arg3: memref<512x128xf32, #tpu.memory_space<vmem>>, %arg4: memref<128x256xf32, #tpu.memory_space<vmem>>, %arg5: memref<512x256xf32, #tpu.memory_space<vmem>>, %arg6: memref<512x256xf32, #tpu.memory_space<vmem>>) attributes {dimension_semantics = [#tpu.dimension_semantics<parallel>, #tpu.dimension_semantics<parallel>, #tpu.dimension_semantics<arbitrary>], iteration_bounds = array<i64: 2, 3, 1>, scalar_prefetch = 0 : i64, scratch_operands = 1 : i64, tpu.core_type = #tpu.core_type<tc>, window_params = [{transform_indices = @transform_0, window_bounds = array<i64: 512, 128>}, {transform_indices = @transform_1, window_bounds = array<i64: 128, 256>}, {transform_indices = @transform_2, window_bounds = array<i64: 512, 256>}]} {
    %c0_i32 = arith.constant 0 : i32
    %0 = arith.cmpi eq, %arg2, %c0_i32 : i32
    %1 = arith.extui %0 : i1 to i32
    %c0_i32_0 = arith.constant 0 : i32
    %2 = arith.cmpi ne, %1, %c0_i32_0 : i32
    scf.if %2 {
      %cst_10 = arith.constant 0.000000e+00 : f32
      %12 = vector.broadcast %cst_10 : f32 to vector<512x256xf32>
      %c0_11 = arith.constant 0 : index
      %c0_12 = arith.constant 0 : index
      %13 = vector.load %arg6[%c0_11, %c0_12] : memref<512x256xf32, #tpu.memory_space<vmem>>, vector<512x256xf32>
      tpu.vector_store %arg6[%c0_11, %c0_12], %12 {strides = array<i32>} : memref<512x256xf32, #tpu.memory_space<vmem>>, vector<512x256xf32>,
    } else {
    }
    %c0 = arith.constant 0 : index
    %c0_1 = arith.constant 0 : index
    %3 = vector.load %arg6[%c0, %c0_1] : memref<512x256xf32, #tpu.memory_space<vmem>>, vector<512x256xf32>
    %c0_2 = arith.constant 0 : index
    %c0_3 = arith.constant 0 : index
    %4 = vector.load %arg3[%c0_2, %c0_3] : memref<512x128xf32, #tpu.memory_space<vmem>>, vector<512x128xf32>
    %c0_4 = arith.constant 0 : index
    %c0_5 = arith.constant 0 : index
    %5 = vector.load %arg4[%c0_4, %c0_5] : memref<128x256xf32, #tpu.memory_space<vmem>>, vector<128x256xf32>
    %cst = arith.constant dense<0.000000e+00> : vector<512x256xf32>
    %6 = tpu.matmul %4, %5, %cst {dimension_numbers = #tpu.dot_dimension_numbers<[1], [0], [0], [1], [0, 0, 1, 1], [], []>} : vector<512x128xf32>, vector<128x256xf32>, vector<512x256xf32> -> vector<512x256xf32>
    %7 = arith.addf %3, %6 : vector<512x256xf32>
    %c0_6 = arith.constant 0 : index
    %c0_7 = arith.constant 0 : index
    %8 = vector.load %arg6[%c0_6, %c0_7] : memref<512x256xf32, #tpu.memory_space<vmem>>, vector<512x256xf32>
    tpu.vector_store %arg6[%c0_6, %c0_7], %7 {strides = array<i32>} : memref<512x256xf32, #tpu.memory_space<vmem>>, vector<512x256xf32>,
    %c0_i32_8 = arith.constant 0 : i32
    %9 = arith.cmpi eq, %arg2, %c0_i32_8 : i32
    %10 = arith.extui %9 : i1 to i32
    %c0_i32_9 = arith.constant 0 : i32
    %11 = arith.cmpi ne, %10, %c0_i32_9 : i32
    scf.if %11 {
      %c0_10 = arith.constant 0 : index
      %c0_11 = arith.constant 0 : index
      %12 = vector.load %arg6[%c0_10, %c0_11] : memref<512x256xf32, #tpu.memory_space<vmem>>, vector<512x256xf32>
      %c0_12 = arith.constant 0 : index
      %c0_13 = arith.constant 0 : index
      %13 = vector.load %arg5[%c0_12, %c0_13] : memref<512x256xf32, #tpu.memory_space<vmem>>, vector<512x256xf32>
      tpu.vector_store %arg5[%c0_12, %c0_13], %12 {strides = array<i32>} : memref<512x256xf32, #tpu.memory_space<vmem>>, vector<512x256xf32>,
    } else {
    }
    return
  }
  func.func @transform_0(%arg0: i32, %arg1: i32, %arg2: i32) -> (i32, i32) {
    %c0_i32 = arith.constant 0 : i32
    return %arg0, %arg2 : i32, i32
  }
  func.func @transform_1(%arg0: i32, %arg1: i32, %arg2: i32) -> (i32, i32) {
    %c0_i32 = arith.constant 0 : i32
    return %arg2, %arg1 : i32, i32
  }
  func.func @transform_2(%arg0: i32, %arg1: i32, %arg2: i32) -> (i32, i32) {
    %c0_i32 = arith.constant 0 : i32
    return %arg0, %arg1 : i32, i32
  }
}

</mosaic_0001>

<llo_original>
// kernel: tpu_custom_call.1
$region0: #{tpu_custom_call.1}
  #allocation0 [shape = 'u32[]', space=smem, size = 0x4, offset = 0x4, fixed_abs, tag = 'smem constant byte address 0x4 - core index']
  #allocation1 [shape = 'u32[144,128]{1,0:T(1,128)}', space=vmem, size = 0x12000, scoped, tag = 'internal scratch']
  #allocation2 [shape = 'f32[512,256]{1,0:T(8,128)}', space=vmem, size = 0x80000, scoped, tag = 'scratch operand']
  %s0 = inlined_call_operand.hbm [shape: f32[1024,128], index: 0, kind: input, shape index: {}]
  %s1 = inlined_call_operand.hbm [shape: f32[128,768], index: 1, kind: input, shape index: {}]
  %s2 = inlined_call_operand.hbm [shape: f32[1024,768], index: 2, kind: output, shape index: {}]
  %s3 = sld [smem:[#allocation0]]
  $region57: #{tpu_custom_call.1} parent=0
    _
  %s5 = ssub.s32 1, %s3
  %s6 = scalar_select 0, %s5, %s3
  $region1: #{tpu_custom_call.1} parent=0
    #allocation3 [shape = 'u8[524288]{0}', space=vmem, size = 0x80000, scoped, tag = 'input window, operand 0']
    #allocation4 [shape = 's32[2]{0}', space=sflag, size = 0x8, scoped, tag = 'scoped memory for tpu_custom_call.1']
    #allocation5 [shape = 's32[2]{0}', space=sflag, size = 0x8, scoped, tag = 'scoped memory for tpu_custom_call.1']
    #allocation6 [shape = 'u8[262144]{0}', space=vmem, size = 0x40000, scoped, tag = 'input window, operand 1']
    #allocation7 [shape = 's32[2]{0}', space=sflag, size = 0x8, scoped, tag = 'scoped memory for tpu_custom_call.1']
    #allocation8 [shape = 'u8[1048576]{0}', space=vmem, size = 0x100000, scoped, tag = 'output window, operand 0']
    %7 = vsyncpa [#allocation4], 0
    %s8 = scalar_lea.sflag [#allocation4], 1
    %9 = vsyncpa %s8, 0
    %10 = vsyncpa [#allocation7], 0
    %s11 = scalar_lea.sflag [#allocation7], 1
    %12 = vsyncpa %s11, 0
    %13 = vsyncpa [#allocation5], 0
    %s14 = scalar_lea.sflag [#allocation5], 1
    %15 = vsyncpa %s14, 0
    loop: start=0, step=1, limit=8
    $region2: #{tpu_custom_call.1} parent=1 // loop_pre_header
      _
    $region3: #{tpu_custom_call.1} parent=1 // loop_header
      %s17 = sphi 0, %s21
      %p18 = scmp.ge.s32.totalorder %s17, 8
      %s24 = sphi 0, %s43
      %s25 = sphi 0, %s39
      %s26 = sphi 0, %s35
      %s27 = sphi 0, %s24
      %s28 = sphi 0, %s25
      %s29 = sphi 0, %s26
      %s30 = sphi 0, %s27
      %s31 = sphi 0, %s28
      %s32 = sphi 0, %s29
      %s48 = sphi 0, %s50
      %s51 = sphi 0, %s48
      %s52 = sphi 0, %s51
      %s68 = sphi 0, %s52
      %s76 = sphi 0, %s78
      %s79 = sphi 0, %s76
      %s80 = sphi 0, %s79
      %s96 = sphi 0, %s80
      %s104 = sphi 0, %s106
      %s107 = sphi 0, %s104
      %s108 = sphi 0, %s107
      %s124 = sphi 0, %s108
    $region4: #{tpu_custom_call.1} parent=1 // loop_header_branch
      %20 = sbr.rel (%p18) target = $region8
    $region5: #{tpu_custom_call.1} parent=1 // loop_body
      %s22 = ssub.s32 %s17, 1
      %s23 = ssub.s32 %s17, 2
      %s33 = sadd.s32 1, %s26
      %p34 = scmp.ge.s32.totalorder %s33, 1
      %s35 = scalar_select %p34, 0, %s33
      %s36 = sadd.s32 1, %s25
      %s37 = scalar_select %p34, %s36, %s25
      %p38 = scmp.ge.s32.totalorder %s37, 3
      %s39 = scalar_select %p38, 0, %s37
      %s40 = sadd.s32 1, %s24
      %s41 = scalar_select %p38, %s40, %s24
      %p42 = scmp.ge.s32.totalorder %s41, 2
      %s43 = scalar_select %p42, 0, %s41
      %s44 = ssub.s32 %s24, %s43
      %s45 = ssub.s32 %s26, %s35
      %s46 = sor.u32 %s44, %s45
      %p47 = scmp.eq.s32.totalorder %s46, 0
      %s49 = sadd.s32 %s48, 1
      %s50 = scalar_select %p47, %s48, %s49
      %p53 = pneg %p47
      %p54 = scmp.eq.s32.totalorder %s17, 5
      %p55 = por %p53, %p54
      %p56 = scmp.ne.s32.totalorder %s48, %s51
      %p57 = scmp.eq.s32.totalorder %s17, 0
      %p58 = por %p56, %p57
      %p59 = scmp.ne.s32.totalorder %s48, %s51
      %p60 = scmp.eq.s32.totalorder %s22, 5
      %p61 = por %p59, %p60
      %p62 = scmp.ne.s32.totalorder %s51, %s52
      %p63 = scmp.eq.s32.totalorder %s22, 0
      %p64 = por %p62, %p63
      %p65 = scmp.ne.s32.totalorder %s51, %s52
      %p66 = scmp.eq.s32.totalorder %s23, 5
      %p67 = por %p65, %p66
      %p69 = scmp.ne.s32.totalorder %s52, %s68
      %p70 = scmp.eq.s32.totalorder %s23, 0
      %p71 = por %p69, %p70
      %s72 = ssub.s32 %s26, %s35
      %s73 = ssub.s32 %s25, %s39
      %s74 = sor.u32 %s72, %s73
      %p75 = scmp.eq.s32.totalorder %s74, 0
      %s77 = sadd.s32 %s76, 1
      %s78 = scalar_select %p75, %s76, %s77
      %p81 = pneg %p75
      %p82 = scmp.eq.s32.totalorder %s17, 5
      %p83 = por %p81, %p82
      %p84 = scmp.ne.s32.totalorder %s76, %s79
      %p85 = scmp.eq.s32.totalorder %s17, 0
      %p86 = por %p84, %p85
      %p87 = scmp.ne.s32.totalorder %s76, %s79
      %p88 = scmp.eq.s32.totalorder %s22, 5
      %p89 = por %p87, %p88
      %p90 = scmp.ne.s32.totalorder %s79, %s80
      %p91 = scmp.eq.s32.totalorder %s22, 0
      %p92 = por %p90, %p91
      %p93 = scmp.ne.s32.totalorder %s79, %s80
      %p94 = scmp.eq.s32.totalorder %s23, 5
      %p95 = por %p93, %p94
      %p97 = scmp.ne.s32.totalorder %s80, %s96
      %p98 = scmp.eq.s32.totalorder %s23, 0
      %p99 = por %p97, %p98
      %s100 = ssub.s32 %s24, %s43
      %s101 = ssub.s32 %s25, %s39
      %s102 = sor.u32 %s100, %s101
      %p103 = scmp.eq.s32.totalorder %s102, 0
      %s105 = sadd.s32 %s104, 1
      %s106 = scalar_select %p103, %s104, %s105
      %p109 = pneg %p103
      %p110 = scmp.eq.s32.totalorder %s17, 5
      %p111 = por %p109, %p110
      %p112 = scmp.ne.s32.totalorder %s104, %s107
      %p113 = scmp.eq.s32.totalorder %s17, 0
      %p114 = por %p112, %p113
      %p115 = scmp.ne.s32.totalorder %s104, %s107
      %p116 = scmp.eq.s32.totalorder %s22, 5
      %p117 = por %p115, %p116
      %p118 = scmp.ne.s32.totalorder %s107, %s108
      %p119 = scmp.eq.s32.totalorder %s22, 0
      %p120 = por %p118, %p119
      %p121 = scmp.ne.s32.totalorder %s107, %s108
      %p122 = scmp.eq.s32.totalorder %s23, 5
      %p123 = por %p121, %p122
      %p125 = scmp.ne.s32.totalorder %s108, %s124
      %p126 = scmp.eq.s32.totalorder %s23, 0
      %p127 = por %p125, %p126
      %p128 = scmp.le.s32.totalorder 1, %s17
      %p129 = scmp.lt.s32.totalorder %s17, 7
      %p130 = pnand %p128, %p129
      %p131 = pneg %p130
      // Predicated region
      $region9: #{tpu_custom_call.1} parent=5 // pred_check
        _
      $region10: #{tpu_custom_call.1} parent=5 // pred_check_branch
        %133 = sbr.rel (%p130) target = $region12
      $region11: #{tpu_custom_call.1} parent=5 // pred_region
        %s134 = ssub.s32 %s17, 1
      $region12: #{tpu_custom_call.1} parent=5 // pred_fallthru
        _
      %p135 = scmp.lt.s32.totalorder %s17, 6
      // Predicated region
      $region13: #{tpu_custom_call.1} parent=5 // pred_check
        %p136 = pneg %p135
      $region14: #{tpu_custom_call.1} parent=5 // pred_check_branch
        %138 = sbr.rel (%p136) target = $region16
      $region15: #{tpu_custom_call.1} parent=5 // pred_region
        // Predicated region
        $region17: #{tpu_custom_call.1} parent=15 // pred_check
          %p139 = pneg %p58
        $region18: #{tpu_custom_call.1} parent=15 // pred_check_branch
          %141 = sbr.rel (%p139) target = $region20
        $region19: #{tpu_custom_call.1} parent=15 // pred_region
          %s142 = sand.u32 %s48, 1
          %s143 = scalar_lea.sflag [#allocation4], %s142
          %s144 = sand.u32 %s48, 1
          %s145 = smul.addr %s144, 512
          %s146 = scalar_lea.vmem [#allocation3], %s145
          %s147 = smul.u32 64, %s24
          %s149 = ssub.s32 8192, 8192
          %150 = vsyncadd %s143, %s149
          %s151 = sadd.s32 %s26, %s147
          %s152 = smul.addr %s151, 128
          %s153 = scalar_lea.hbm %s0, %s152
          %s154 = sshll.u32 %s146, 4
          %s155 = int_to_ptr.vmem [resolvable:$true] %s154
          %160 = dma.hbm_to_vmem [thread:$0]  %s153, 8192, %s155, %s143, 128, 128, 8
        $region20: #{tpu_custom_call.1} parent=15 // pred_fallthru
          _
        // Predicated region
        $region21: #{tpu_custom_call.1} parent=15 // pred_check
          %p161 = pneg %p86
        $region22: #{tpu_custom_call.1} parent=15 // pred_check_branch
          %163 = sbr.rel (%p161) target = $region24
        $region23: #{tpu_custom_call.1} parent=15 // pred_region
          %s164 = sand.u32 %s76, 1
          %s165 = scalar_lea.sflag [#allocation7], %s164
          %s166 = sand.u32 %s76, 1
          %s167 = smul.addr %s166, 256
          %s168 = scalar_lea.vmem [#allocation6], %s167
          %s169 = smul.u32 16, %s26
          %s170 = smul.u32 2, %s25
          %s172 = ssub.s32 4096, 4096
          %173 = vsyncadd %s165, %s172
          %s174 = smul.addr %s169, 6
          %s175 = sadd.s32 %s170, %s174
          %s176 = smul.addr %s175, 128
          %s177 = scalar_lea.hbm %s1, %s176
          %s178 = sshll.u32 %s168, 4
          %s179 = int_to_ptr.vmem [resolvable:$true] %s178
          %184 = dma.hbm_to_vmem [thread:$0]  %s177, 4096, %s179, %s165, 768, 256, 16
        $region24: #{tpu_custom_call.1} parent=15 // pred_fallthru
          _
      $region16: #{tpu_custom_call.1} parent=5 // pred_fallthru
        _
      %p185 = scmp.le.s32.totalorder 1, %s17
      %p186 = scmp.lt.s32.totalorder %s17, 7
      %p187 = pnand %p185, %p186
      %p188 = pneg %p187
      // Predicated region
      $region25: #{tpu_custom_call.1} parent=5 // pred_check
        _
      $region26: #{tpu_custom_call.1} parent=5 // pred_check_branch
        %190 = sbr.rel (%p187) target = $region28
      $region27: #{tpu_custom_call.1} parent=5 // pred_region
        %s191 = ssub.s32 %s17, 1
        %s192 = sand.u32 %s51, 1
        %s193 = scalar_lea.sflag [#allocation4], %s192
        %s194 = sand.u32 %s51, 1
        %s195 = smul.addr %s194, 512
        %s196 = scalar_lea.vmem [#allocation3], %s195
        // Predicated region
        $region29: #{tpu_custom_call.1} parent=27 // pred_check
          %p197 = pneg %p64
        $region30: #{tpu_custom_call.1} parent=27 // pred_check_branch
          %199 = sbr.rel (%p197) target = $region32
        $region31: #{tpu_custom_call.1} parent=27 // pred_region
          %200 = dma.done %s193, 8192
        $region32: #{tpu_custom_call.1} parent=27 // pred_fallthru
          _
        %s201 = sand.u32 %s79, 1
        %s202 = scalar_lea.sflag [#allocation7], %s201
        %s203 = sand.u32 %s79, 1
        %s204 = smul.addr %s203, 256
        %s205 = scalar_lea.vmem [#allocation6], %s204
        // Predicated region
        $region33: #{tpu_custom_call.1} parent=27 // pred_check
          %p206 = pneg %p92
        $region34: #{tpu_custom_call.1} parent=27 // pred_check_branch
          %208 = sbr.rel (%p206) target = $region36
        $region35: #{tpu_custom_call.1} parent=27 // pred_region
          %209 = dma.done %s202, 4096
        $region36: #{tpu_custom_call.1} parent=27 // pred_fallthru
          _
        %s210 = sand.u32 %s51, 1
        %s211 = scalar_lea.sflag [#allocation4], %s210
        %s212 = sand.u32 %s51, 1
        %s213 = smul.addr %s212, 512
        %s214 = scalar_lea.vmem [#allocation3], %s213
        %p215 = pneg %p64
        %p216 = pneg %p61
        %s217 = sand.u32 %s79, 1
        %s218 = scalar_lea.sflag [#allocation7], %s217
        %s219 = sand.u32 %s79, 1
        %s220 = smul.addr %s219, 256
        %s221 = scalar_lea.vmem [#allocation6], %s220
        %p222 = pneg %p92
        %p223 = pneg %p89
        %p224 = pneg %p120
        %p225 = pneg %p117
        %s226 = sand.u32 %s107, 1
        %s227 = scalar_lea.sflag [#allocation5], %s226
        %s228 = sand.u32 %s107, 1
        %s229 = smul.addr %s228, 1024
        %s230 = scalar_lea.vmem [#allocation8], %s229
        %s231 = smul.u32 64, %s27
        %s232 = smul.u32 16, %s29
        %s233 = smul.u32 2, %s28
        %s234 = smul.u32 64, %s27
        %s235 = smul.u32 2, %s28
        %p236 = scmp.eq.s32.totalorder %s29, 0
        // Predicated region
        $region37: #{tpu_custom_call.1} parent=27 // pred_check
          %p237 = pneg %p236
        $region38: #{tpu_custom_call.1} parent=27 // pred_check_branch
          %239 = sbr.rel (%p237) target = $region40
        $region39: #{tpu_custom_call.1} parent=27 // pred_region
          %240 = vst [vmem:[#allocation2] sm:$0xff] 0.0
          %241 = vst [vmem:[#allocation2 + $0x8] sm:$0xff] 0.0
          %242 = vst [vmem:[#allocation2 + $0x10] sm:$0xff] 0.0
          %243 = vst [vmem:[#allocation2 + $0x18] sm:$0xff] 0.0
          %244 = vst [vmem:[#allocation2 + $0x20] sm:$0xff] 0.0
          %245 = vst [vmem:[#allocation2 + $0x28] sm:$0xff] 0.0
          %246 = vst [vmem:[#allocation2 + $0x30] sm:$0xff] 0.0
          %247 = vst [vmem:[#allocation2 + $0x38] sm:$0xff] 0.0
          %248 = vst [vmem:[#allocation2 + $0x40] sm:$0xff] 0.0
          %249 = vst [vmem:[#allocation2 + $0x48] sm:$0xff] 0.0
          %250 = vst [vmem:[#allocation2 + $0x50] sm:$0xff] 0.0
          %251 = vst [vmem:[#allocation2 + $0x58] sm:$0xff] 0.0
          %252 = vst [vmem:[#allocation2 + $0x60] sm:$0xff] 0.0
          %253 = vst [vmem:[#allocation2 + $0x68] sm:$0xff] 0.0
          %254 = vst [vmem:[#allocation2 + $0x70] sm:$0xff] 0.0
          %255 = vst [vmem:[#allocation2 + $0x78] sm:$0xff] 0.0
          %256 = vst [vmem:[#allocation2 + $0x80] sm:$0xff] 0.0
          %257 = vst [vmem:[#allocation2 + $0x88] sm:$0xff] 0.0
          %258 = vst [vmem:[#allocation2 + $0x90] sm:$0xff] 0.0
          %259 = vst [vmem:[#allocation2 + $0x98] sm:$0xff] 0.0
          %260 = vst [vmem:[#allocation2 + $0xa0] sm:$0xff] 0.0
          %261 = vst [vmem:[#allocation2 + $0xa8] sm:$0xff] 0.0
          %262 = vst [vmem:[#allocation2 + $0xb0] sm:$0xff] 0.0
          %263 = vst [vmem:[#allocation2 + $0xb8] sm:$0xff] 0.0
          %264 = vst [vmem:[#allocation2 + $0xc0] sm:$0xff] 0.0
          %265 = vst [vmem:[#allocation2 + $0xc8] sm:$0xff] 0.0
          %266 = vst [vmem:[#allocation2 + $0xd0] sm:$0xff] 0.0
          %267 = vst [vmem:[#allocation2 + $0xd8] sm:$0xff] 0.0
          %268 = vst [vmem:[#allocation2 + $0xe0] sm:$0xff] 0.0
          %269 = vst [vmem:[#allocation2 + $0xe8] sm:$0xff] 0.0
          %270 = vst [vmem:[#allocation2 + $0xf0] sm:$0xff] 0.0
          %271 = vst [vmem:[#allocation2 + $0xf8] sm:$0xff] 0.0
          %272 = vst [vmem:[#allocation2 + $0x100] sm:$0xff] 0.0
          %273 = vst [vmem:[#allocation2 + $0x108] sm:$0xff] 0.0
          %274 = vst [vmem:[#allocation2 + $0x110] sm:$0xff] 0.0
          %275 = vst [vmem:[#allocation2 + $0x118] sm:$0xff] 0.0
          %276 = vst [vmem:[#allocation2 + $0x120] sm:$0xff] 0.0
          %277 = vst [vmem:[#allocation2 + $0x128] sm:$0xff] 0.0
          %278 = vst [vmem:[#allocation2 + $0x130] sm:$0xff] 0.0
          %279 = vst [vmem:[#allocation2 + $0x138] sm:$0xff] 0.0
          %280 = vst [vmem:[#allocation2 + $0x140] sm:$0xff] 0.0
          %281 = vst [vmem:[#allocation2 + $0x148] sm:$0xff] 0.0
          %282 = vst [vmem:[#allocation2 + $0x150] sm:$0xff] 0.0
          %283 = vst [vmem:[#allocation2 + $0x158] sm:$0xff] 0.0
          %284 = vst [vmem:[#allocation2 + $0x160] sm:$0xff] 0.0
          %285 = vst [vmem:[#allocation2 + $0x168] sm:$0xff] 0.0
          %286 = vst [vmem:[#allocation2 + $0x170] sm:$0xff] 0.0
          %287 = vst [vmem:[#allocation2 + $0x178] sm:$0xff] 0.0
          %288 = vst [vmem:[#allocation2 + $0x180] sm:$0xff] 0.0
          %289 = vst [vmem:[#allocation2 + $0x188] sm:$0xff] 0.0
          %290 = vst [vmem:[#allocation2 + $0x190] sm:$0xff] 0.0
          %291 = vst [vmem:[#allocation2 + $0x198] sm:$0xff] 0.0
          %292 = vst [vmem:[#allocation2 + $0x1a0] sm:$0xff] 0.0
          %293 = vst [vmem:[#allocation2 + $0x1a8] sm:$0xff] 0.0
          %294 = vst [vmem:[#allocation2 + $0x1b0] sm:$0xff] 0.0
          %295 = vst [vmem:[#allocation2 + $0x1b8] sm:$0xff] 0.0
          %296 = vst [vmem:[#allocation2 + $0x1c0] sm:$0xff] 0.0
          %297 = vst [vmem:[#allocation2 + $0x1c8] sm:$0xff] 0.0
          %298 = vst [vmem:[#allocation2 + $0x1d0] sm:$0xff] 0.0
          %299 = vst [vmem:[#allocation2 + $0x1d8] sm:$0xff] 0.0
          %300 = vst [vmem:[#allocation2 + $0x1e0] sm:$0xff] 0.0
          %301 = vst [vmem:[#allocation2 + $0x1e8] sm:$0xff] 0.0
          %302 = vst [vmem:[#allocation2 + $0x1f0] sm:$0xff] 0.0
          %303 = vst [vmem:[#allocation2 + $0x1f8] sm:$0xff] 0.0
          %304 = vst [vmem:[#allocation2 + $0x200] sm:$0xff] 0.0
          %305 = vst [vmem:[#allocation2 + $0x208] sm:$0xff] 0.0
          %306 = vst [vmem:[#allocation2 + $0x210] sm:$0xff] 0.0
          %307 = vst [vmem:[#allocation2 + $0x218] sm:$0xff] 0.0
          %308 = vst [vmem:[#allocation2 + $0x220] sm:$0xff] 0.0
          %309 = vst [vmem:[#allocation2 + $0x228] sm:$0xff] 0.0
          %310 = vst [vmem:[#allocation2 + $0x230] sm:$0xff] 0.0
          %311 = vst [vmem:[#allocation2 + $0x238] sm:$0xff] 0.0
          %312 = vst [vmem:[#allocation2 + $0x240] sm:$0xff] 0.0
          %313 = vst [vmem:[#allocation2 + $0x248] sm:$0xff] 0.0
          %314 = vst [vmem:[#allocation2 + $0x250] sm:$0xff] 0.0
          %315 = vst [vmem:[#allocation2 + $0x258] sm:$0xff] 0.0
          %316 = vst [vmem:[#allocation2 + $0x260] sm:$0xff] 0.0
          %317 = vst [vmem:[#allocation2 + $0x268] sm:$0xff] 0.0
          %318 = vst [vmem:[#allocation2 + $0x270] sm:$0xff] 0.0
          %319 = vst [vmem:[#allocation2 + $0x278] sm:$0xff] 0.0
          %320 = vst [vmem:[#allocation2 + $0x280] sm:$0xff] 0.0
          %321 = vst [vmem:[#allocation2 + $0x288] sm:$0xff] 0.0
          %322 = vst [vmem:[#allocation2 + $0x290] sm:$0xff] 0.0
          %323 = vst [vmem:[#allocation2 + $0x298] sm:$0xff] 0.0
          %324 = vst [vmem:[#allocation2 + $0x2a0] sm:$0xff] 0.0
          %325 = vst [vmem:[#allocation2 + $0x2a8] sm:$0xff] 0.0
          %326 = vst [vmem:[#allocation2 + $0x2b0] sm:$0xff] 0.0
          %327 = vst [vmem:[#allocation2 + $0x2b8] sm:$0xff] 0.0
          %328 = vst [vmem:[#allocation2 + $0x2c0] sm:$0xff] 0.0
          %329 = vst [vmem:[#allocation2 + $0x2c8] sm:$0xff] 0.0
          %330 = vst [vmem:[#allocation2 + $0x2d0] sm:$0xff] 0.0
          %331 = vst [vmem:[#allocation2 + $0x2d8] sm:$0xff] 0.0
          %332 = vst [vmem:[#allocation2 + $0x2e0] sm:$0xff] 0.0
          %333 = vst [vmem:[#allocation2 + $0x2e8] sm:$0xff] 0.0
          %334 = vst [vmem:[#allocation2 + $0x2f0] sm:$0xff] 0.0
          %335 = vst [vmem:[#allocation2 + $0x2f8] sm:$0xff] 0.0
          %336 = vst [vmem:[#allocation2 + $0x300] sm:$0xff] 0.0
          %337 = vst [vmem:[#allocation2 + $0x308] sm:$0xff] 0.0
          %338 = vst [vmem:[#allocation2 + $0x310] sm:$0xff] 0.0
          %339 = vst [vmem:[#allocation2 + $0x318] sm:$0xff] 0.0
          %340 = vst [vmem:[#allocation2 + $0x320] sm:$0xff] 0.0
          %341 = vst [vmem:[#allocation2 + $0x328] sm:$0xff] 0.0
          %342 = vst [vmem:[#allocation2 + $0x330] sm:$0xff] 0.0
          %343 = vst [vmem:[#allocation2 + $0x338] sm:$0xff] 0.0
          %344 = vst [vmem:[#allocation2 + $0x340] sm:$0xff] 0.0
          %345 = vst [vmem:[#allocation2 + $0x348] sm:$0xff] 0.0
          %346 = vst [vmem:[#allocation2 + $0x350] sm:$0xff] 0.0
          %347 = vst [vmem:[#allocation2 + $0x358] sm:$0xff] 0.0
          %348 = vst [vmem:[#allocation2 + $0x360] sm:$0xff] 0.0
          %349 = vst [vmem:[#allocation2 + $0x368] sm:$0xff] 0.0
          %350 = vst [vmem:[#allocation2 + $0x370] sm:$0xff] 0.0
          %351 = vst [vmem:[#allocation2 + $0x378] sm:$0xff] 0.0
          %352 = vst [vmem:[#allocation2 + $0x380] sm:$0xff] 0.0
          %353 = vst [vmem:[#allocation2 + $0x388] sm:$0xff] 0.0
          %354 = vst [vmem:[#allocation2 + $0x390] sm:$0xff] 0.0
          %355 = vst [vmem:[#allocation2 + $0x398] sm:$0xff] 0.0
          %356 = vst [vmem:[#allocation2 + $0x3a0] sm:$0xff] 0.0
          %357 = vst [vmem:[#allocation2 + $0x3a8] sm:$0xff] 0.0
          %358 = vst [vmem:[#allocation2 + $0x3b0] sm:$0xff] 0.0
          %359 = vst [vmem:[#allocation2 + $0x3b8] sm:$0xff] 0.0
          %360 = vst [vmem:[#allocation2 + $0x3c0] sm:$0xff] 0.0
          %361 = vst [vmem:[#allocation2 + $0x3c8] sm:$0xff] 0.0
          %362 = vst [vmem:[#allocation2 + $0x3d0] sm:$0xff] 0.0
          %363 = vst [vmem:[#allocation2 + $0x3d8] sm:$0xff] 0.0
          %364 = vst [vmem:[#allocation2 + $0x3e0] sm:$0xff] 0.0
          %365 = vst [vmem:[#allocation2 + $0x3e8] sm:$0xff] 0.0
          %366 = vst [vmem:[#allocation2 + $0x3f0] sm:$0xff] 0.0
          %367 = vst [vmem:[#allocation2 + $0x3f8] sm:$0xff] 0.0
        $region40: #{tpu_custom_call.1} parent=27 // pred_fallthru
          _
        %v368 = vld [vmem:[#allocation2] sm:$0xff]
        %v369 = vld [vmem:[#allocation2 + $0x8] sm:$0xff]
        %v370 = vld [vmem:[#allocation2 + $0x10] sm:$0xff]
        %v371 = vld [vmem:[#allocation2 + $0x18] sm:$0xff]
        %v372 = vld [vmem:[#allocation2 + $0x20] sm:$0xff]
        %v373 = vld [vmem:[#allocation2 + $0x28] sm:$0xff]
        %v374 = vld [vmem:[#allocation2 + $0x30] sm:$0xff]
        %v375 = vld [vmem:[#allocation2 + $0x38] sm:$0xff]
        %v376 = vld [vmem:[#allocation2 + $0x40] sm:$0xff]
        %v377 = vld [vmem:[#allocation2 + $0x48] sm:$0xff]
        %v378 = vld [vmem:[#allocation2 + $0x50] sm:$0xff]
        %v379 = vld [vmem:[#allocation2 + $0x58] sm:$0xff]
        %v380 = vld [vmem:[#allocation2 + $0x60] sm:$0xff]
        %v381 = vld [vmem:[#allocation2 + $0x68] sm:$0xff]
        %v382 = vld [vmem:[#allocation2 + $0x70] sm:$0xff]
        %v383 = vld [vmem:[#allocation2 + $0x78] sm:$0xff]
        %v384 = vld [vmem:[#allocation2 + $0x80] sm:$0xff]
        %v385 = vld [vmem:[#allocation2 + $0x88] sm:$0xff]
        %v386 = vld [vmem:[#allocation2 + $0x90] sm:$0xff]
        %v387 = vld [vmem:[#allocation2 + $0x98] sm:$0xff]
        %v388 = vld [vmem:[#allocation2 + $0xa0] sm:$0xff]
        %v389 = vld [vmem:[#allocation2 + $0xa8] sm:$0xff]
        %v390 = vld [vmem:[#allocation2 + $0xb0] sm:$0xff]
        %v391 = vld [vmem:[#allocation2 + $0xb8] sm:$0xff]
        %v392 = vld [vmem:[#allocation2 + $0xc0] sm:$0xff]
        %v393 = vld [vmem:[#allocation2 + $0xc8] sm:$0xff]
        %v394 = vld [vmem:[#allocation2 + $0xd0] sm:$0xff]
        %v395 = vld [vmem:[#allocation2 + $0xd8] sm:$0xff]
        %v396 = vld [vmem:[#allocation2 + $0xe0] sm:$0xff]
        %v397 = vld [vmem:[#allocation2 + $0xe8] sm:$0xff]
        %v398 = vld [vmem:[#allocation2 + $0xf0] sm:$0xff]
        %v399 = vld [vmem:[#allocation2 + $0xf8] sm:$0xff]
        %v400 = vld [vmem:[#allocation2 + $0x100] sm:$0xff]
        %v401 = vld [vmem:[#allocation2 + $0x108] sm:$0xff]
        %v402 = vld [vmem:[#allocation2 + $0x110] sm:$0xff]
        %v403 = vld [vmem:[#allocation2 + $0x118] sm:$0xff]
        %v404 = vld [vmem:[#allocation2 + $0x120] sm:$0xff]
        %v405 = vld [vmem:[#allocation2 + $0x128] sm:$0xff]
        %v406 = vld [vmem:[#allocation2 + $0x130] sm:$0xff]
        %v407 = vld [vmem:[#allocation2 + $0x138] sm:$0xff]
        %v408 = vld [vmem:[#allocation2 + $0x140] sm:$0xff]
        %v409 = vld [vmem:[#allocation2 + $0x148] sm:$0xff]
        %v410 = vld [vmem:[#allocation2 + $0x150] sm:$0xff]
        %v411 = vld [vmem:[#allocation2 + $0x158] sm:$0xff]
        %v412 = vld [vmem:[#allocation2 + $0x160] sm:$0xff]
        %v413 = vld [vmem:[#allocation2 + $0x168] sm:$0xff]
        %v414 = vld [vmem:[#allocation2 + $0x170] sm:$0xff]
        %v415 = vld [vmem:[#allocation2 + $0x178] sm:$0xff]
        %v416 = vld [vmem:[#allocation2 + $0x180] sm:$0xff]
        %v417 = vld [vmem:[#allocation2 + $0x188] sm:$0xff]
        %v418 = vld [vmem:[#allocation2 + $0x190] sm:$0xff]
        %v419 = vld [vmem:[#allocation2 + $0x198] sm:$0xff]
        %v420 = vld [vmem:[#allocation2 + $0x1a0] sm:$0xff]
        %v421 = vld [vmem:[#allocation2 + $0x1a8] sm:$0xff]
        %v422 = vld [vmem:[#allocation2 + $0x1b0] sm:$0xff]
        %v423 = vld [vmem:[#allocation2 + $0x1b8] sm:$0xff]
        %v424 = vld [vmem:[#allocation2 + $0x1c0] sm:$0xff]
        %v425 = vld [vmem:[#allocation2 + $0x1c8] sm:$0xff]
        %v426 = vld [vmem:[#allocation2 + $0x1d0] sm:$0xff]
        %v427 = vld [vmem:[#allocation2 + $0x1d8] sm:$0xff]
        %v428 = vld [vmem:[#allocation2 + $0x1e0] sm:$0xff]
        %v429 = vld [vmem:[#allocation2 + $0x1e8] sm:$0xff]
        %v430 = vld [vmem:[#allocation2 + $0x1f0] sm:$0xff]
        %v431 = vld [vmem:[#allocation2 + $0x1f8] sm:$0xff]
        %v432 = vld [vmem:[#allocation2 + $0x200] sm:$0xff]
        %v433 = vld [vmem:[#allocation2 + $0x208] sm:$0xff]
        %v434 = vld [vmem:[#allocation2 + $0x210] sm:$0xff]
        %v435 = vld [vmem:[#allocation2 + $0x218] sm:$0xff]
        %v436 = vld [vmem:[#allocation2 + $0x220] sm:$0xff]
        %v437 = vld [vmem:[#allocation2 + $0x228] sm:$0xff]
        %v438 = vld [vmem:[#allocation2 + $0x230] sm:$0xff]
        %v439 = vld [vmem:[#allocation2 + $0x238] sm:$0xff]
        %v440 = vld [vmem:[#allocation2 + $0x240] sm:$0xff]
        %v441 = vld [vmem:[#allocation2 + $0x248] sm:$0xff]
        %v442 = vld [vmem:[#allocation2 + $0x250] sm:$0xff]
        %v443 = vld [vmem:[#allocation2 + $0x258] sm:$0xff]
        %v444 = vld [vmem:[#allocation2 + $0x260] sm:$0xff]
        %v445 = vld [vmem:[#allocation2 + $0x268] sm:$0xff]
        %v446 = vld [vmem:[#allocation2 + $0x270] sm:$0xff]
        %v447 = vld [vmem:[#allocation2 + $0x278] sm:$0xff]
        %v448 = vld [vmem:[#allocation2 + $0x280] sm:$0xff]
        %v449 = vld [vmem:[#allocation2 + $0x288] sm:$0xff]
        %v450 = vld [vmem:[#allocation2 + $0x290] sm:$0xff]
        %v451 = vld [vmem:[#allocation2 + $0x298] sm:$0xff]
        %v452 = vld [vmem:[#allocation2 + $0x2a0] sm:$0xff]
        %v453 = vld [vmem:[#allocation2 + $0x2a8] sm:$0xff]
        %v454 = vld [vmem:[#allocation2 + $0x2b0] sm:$0xff]
        %v455 = vld [vmem:[#allocation2 + $0x2b8] sm:$0xff]
        %v456 = vld [vmem:[#allocation2 + $0x2c0] sm:$0xff]
        %v457 = vld [vmem:[#allocation2 + $0x2c8] sm:$0xff]
        %v458 = vld [vmem:[#allocation2 + $0x2d0] sm:$0xff]
        %v459 = vld [vmem:[#allocation2 + $0x2d8] sm:$0xff]
        %v460 = vld [vmem:[#allocation2 + $0x2e0] sm:$0xff]
        %v461 = vld [vmem:[#allocation2 + $0x2e8] sm:$0xff]
        %v462 = vld [vmem:[#allocation2 + $0x2f0] sm:$0xff]
        %v463 = vld [vmem:[#allocation2 + $0x2f8] sm:$0xff]
        %v464 = vld [vmem:[#allocation2 + $0x300] sm:$0xff]
        %v465 = vld [vmem:[#allocation2 + $0x308] sm:$0xff]
        %v466 = vld [vmem:[#allocation2 + $0x310] sm:$0xff]
        %v467 = vld [vmem:[#allocation2 + $0x318] sm:$0xff]
        %v468 = vld [vmem:[#allocation2 + $0x320] sm:$0xff]
        %v469 = vld [vmem:[#allocation2 + $0x328] sm:$0xff]
        %v470 = vld [vmem:[#allocation2 + $0x330] sm:$0xff]
        %v471 = vld [vmem:[#allocation2 + $0x338] sm:$0xff]
        %v472 = vld [vmem:[#allocation2 + $0x340] sm:$0xff]
        %v473 = vld [vmem:[#allocation2 + $0x348] sm:$0xff]
        %v474 = vld [vmem:[#allocation2 + $0x350] sm:$0xff]
        %v475 = vld [vmem:[#allocation2 + $0x358] sm:$0xff]
        %v476 = vld [vmem:[#allocation2 + $0x360] sm:$0xff]
        %v477 = vld [vmem:[#allocation2 + $0x368] sm:$0xff]
        %v478 = vld [vmem:[#allocation2 + $0x370] sm:$0xff]
        %v479 = vld [vmem:[#allocation2 + $0x378] sm:$0xff]
        %v480 = vld [vmem:[#allocation2 + $0x380] sm:$0xff]
        %v481 = vld [vmem:[#allocation2 + $0x388] sm:$0xff]
        %v482 = vld [vmem:[#allocation2 + $0x390] sm:$0xff]
        %v483 = vld [vmem:[#allocation2 + $0x398] sm:$0xff]
        %v484 = vld [vmem:[#allocation2 + $0x3a0] sm:$0xff]
        %v485 = vld [vmem:[#allocation2 + $0x3a8] sm:$0xff]
        %v486 = vld [vmem:[#allocation2 + $0x3b0] sm:$0xff]
        %v487 = vld [vmem:[#allocation2 + $0x3b8] sm:$0xff]
        %v488 = vld [vmem:[#allocation2 + $0x3c0] sm:$0xff]
        %v489 = vld [vmem:[#allocation2 + $0x3c8] sm:$0xff]
        %v490 = vld [vmem:[#allocation2 + $0x3d0] sm:$0xff]
        %v491 = vld [vmem:[#allocation2 + $0x3d8] sm:$0xff]
        %v492 = vld [vmem:[#allocation2 + $0x3e0] sm:$0xff]
        %v493 = vld [vmem:[#allocation2 + $0x3e8] sm:$0xff]
        %v494 = vld [vmem:[#allocation2 + $0x3f0] sm:$0xff]
        %v495 = vld [vmem:[#allocation2 + $0x3f8] sm:$0xff]
        %v496 = vld [vmem:[%s196] sm:$0xff]
        %v497 = vld [vmem:[%s196 + $0x8] sm:$0xff]
        %v498 = vld [vmem:[%s196 + $0x10] sm:$0xff]
        %v499 = vld [vmem:[%s196 + $0x18] sm:$0xff]
        %v500 = vld [vmem:[%s196 + $0x20] sm:$0xff]
        %v501 = vld [vmem:[%s196 + $0x28] sm:$0xff]
        %v502 = vld [vmem:[%s196 + $0x30] sm:$0xff]
        %v503 = vld [vmem:[%s196 + $0x38] sm:$0xff]
        %v504 = vld [vmem:[%s196 + $0x40] sm:$0xff]
        %v505 = vld [vmem:[%s196 + $0x48] sm:$0xff]
        %v506 = vld [vmem:[%s196 + $0x50] sm:$0xff]
        %v507 = vld [vmem:[%s196 + $0x58] sm:$0xff]
        %v508 = vld [vmem:[%s196 + $0x60] sm:$0xff]
        %v509 = vld [vmem:[%s196 + $0x68] sm:$0xff]
        %v510 = vld [vmem:[%s196 + $0x70] sm:$0xff]
        %v511 = vld [vmem:[%s196 + $0x78] sm:$0xff]
        %v512 = vld [vmem:[%s196 + $0x80] sm:$0xff]
        %v513 = vld [vmem:[%s196 + $0x88] sm:$0xff]
        %v514 = vld [vmem:[%s196 + $0x90] sm:$0xff]
        %v515 = vld [vmem:[%s196 + $0x98] sm:$0xff]
        %v516 = vld [vmem:[%s196 + $0xa0] sm:$0xff]
        %v517 = vld [vmem:[%s196 + $0xa8] sm:$0xff]
        %v518 = vld [vmem:[%s196 + $0xb0] sm:$0xff]
        %v519 = vld [vmem:[%s196 + $0xb8] sm:$0xff]
        %v520 = vld [vmem:[%s196 + $0xc0] sm:$0xff]
        %v521 = vld [vmem:[%s196 + $0xc8] sm:$0xff]
        %v522 = vld [vmem:[%s196 + $0xd0] sm:$0xff]
        %v523 = vld [vmem:[%s196 + $0xd8] sm:$0xff]
        %v524 = vld [vmem:[%s196 + $0xe0] sm:$0xff]
        %v525 = vld [vmem:[%s196 + $0xe8] sm:$0xff]
        %v526 = vld [vmem:[%s196 + $0xf0] sm:$0xff]
        %v527 = vld [vmem:[%s196 + $0xf8] sm:$0xff]
        %v528 = vld [vmem:[%s196 + $0x100] sm:$0xff]
        %v529 = vld [vmem:[%s196 + $0x108] sm:$0xff]
        %v530 = vld [vmem:[%s196 + $0x110] sm:$0xff]
        %v531 = vld [vmem:[%s196 + $0x118] sm:$0xff]
        %v532 = vld [vmem:[%s196 + $0x120] sm:$0xff]
        %v533 = vld [vmem:[%s196 + $0x128] sm:$0xff]
        %v534 = vld [vmem:[%s196 + $0x130] sm:$0xff]
        %v535 = vld [vmem:[%s196 + $0x138] sm:$0xff]
        %v536 = vld [vmem:[%s196 + $0x140] sm:$0xff]
        %v537 = vld [vmem:[%s196 + $0x148] sm:$0xff]
        %v538 = vld [vmem:[%s196 + $0x150] sm:$0xff]
        %v539 = vld [vmem:[%s196 + $0x158] sm:$0xff]
        %v540 = vld [vmem:[%s196 + $0x160] sm:$0xff]
        %v541 = vld [vmem:[%s196 + $0x168] sm:$0xff]
        %v542 = vld [vmem:[%s196 + $0x170] sm:$0xff]
        %v543 = vld [vmem:[%s196 + $0x178] sm:$0xff]
        %v544 = vld [vmem:[%s196 + $0x180] sm:$0xff]
        %v545 = vld [vmem:[%s196 + $0x188] sm:$0xff]
        %v546 = vld [vmem:[%s196 + $0x190] sm:$0xff]
        %v547 = vld [vmem:[%s196 + $0x198] sm:$0xff]
        %v548 = vld [vmem:[%s196 + $0x1a0] sm:$0xff]
        %v549 = vld [vmem:[%s196 + $0x1a8] sm:$0xff]
        %v550 = vld [vmem:[%s196 + $0x1b0] sm:$0xff]
        %v551 = vld [vmem:[%s196 + $0x1b8] sm:$0xff]
        %v552 = vld [vmem:[%s196 + $0x1c0] sm:$0xff]
        %v553 = vld [vmem:[%s196 + $0x1c8] sm:$0xff]
        %v554 = vld [vmem:[%s196 + $0x1d0] sm:$0xff]
        %v555 = vld [vmem:[%s196 + $0x1d8] sm:$0xff]
        %v556 = vld [vmem:[%s196 + $0x1e0] sm:$0xff]
        %v557 = vld [vmem:[%s196 + $0x1e8] sm:$0xff]
        %v558 = vld [vmem:[%s196 + $0x1f0] sm:$0xff]
        %v559 = vld [vmem:[%s196 + $0x1f8] sm:$0xff]
        %v560 = vld [vmem:[%s205] sm:$0xff]
        %v561 = vld [vmem:[%s205 + $0x8] sm:$0xff]
        %v562 = vld [vmem:[%s205 + $0x10] sm:$0xff]
        %v563 = vld [vmem:[%s205 + $0x18] sm:$0xff]
        %v564 = vld [vmem:[%s205 + $0x20] sm:$0xff]
        %v565 = vld [vmem:[%s205 + $0x28] sm:$0xff]
        %v566 = vld [vmem:[%s205 + $0x30] sm:$0xff]
        %v567 = vld [vmem:[%s205 + $0x38] sm:$0xff]
        %v568 = vld [vmem:[%s205 + $0x40] sm:$0xff]
        %v569 = vld [vmem:[%s205 + $0x48] sm:$0xff]
        %v570 = vld [vmem:[%s205 + $0x50] sm:$0xff]
        %v571 = vld [vmem:[%s205 + $0x58] sm:$0xff]
        %v572 = vld [vmem:[%s205 + $0x60] sm:$0xff]
        %v573 = vld [vmem:[%s205 + $0x68] sm:$0xff]
        %v574 = vld [vmem:[%s205 + $0x70] sm:$0xff]
        %v575 = vld [vmem:[%s205 + $0x78] sm:$0xff]
        %v576 = vld [vmem:[%s205 + $0x80] sm:$0xff]
        %v577 = vld [vmem:[%s205 + $0x88] sm:$0xff]
        %v578 = vld [vmem:[%s205 + $0x90] sm:$0xff]
        %v579 = vld [vmem:[%s205 + $0x98] sm:$0xff]
        %v580 = vld [vmem:[%s205 + $0xa0] sm:$0xff]
        %v581 = vld [vmem:[%s205 + $0xa8] sm:$0xff]
        %v582 = vld [vmem:[%s205 + $0xb0] sm:$0xff]
        %v583 = vld [vmem:[%s205 + $0xb8] sm:$0xff]
        %v584 = vld [vmem:[%s205 + $0xc0] sm:$0xff]
        %v585 = vld [vmem:[%s205 + $0xc8] sm:$0xff]
        %v586 = vld [vmem:[%s205 + $0xd0] sm:$0xff]
        %v587 = vld [vmem:[%s205 + $0xd8] sm:$0xff]
        %v588 = vld [vmem:[%s205 + $0xe0] sm:$0xff]
        %v589 = vld [vmem:[%s205 + $0xe8] sm:$0xff]
        %v590 = vld [vmem:[%s205 + $0xf0] sm:$0xff]
        %v591 = vld [vmem:[%s205 + $0xf8] sm:$0xff]
        %592 = vmatprep.subr.mxu0 %v561
        %593 = vmatpush1.msra.mxu0 %v560
        %594 = vmatprep.subr.mxu0 %v563
        %595 = vmatpush1.msra.mxu0 %v562
        %596 = vmatprep.subr.mxu0 %v565
        %597 = vmatpush1.msra.mxu0 %v564
        %598 = vmatprep.subr.mxu0 %v567
        %599 = vmatpush1.msra.mxu0 %v566
        %600 = vmatprep.subr.mxu0 %v569
        %601 = vmatpush1.msra.mxu0 %v568
        %602 = vmatprep.subr.mxu0 %v571
        %603 = vmatpush1.msra.mxu0 %v570
        %604 = vmatprep.subr.mxu0 %v573
        %605 = vmatpush1.msra.mxu0 %v572
        %606 = vmatprep.subr.mxu0 %v575
        %607 = vmatpush1.msra.mxu0 %v574
        %608 = vmatprep.subr.mxu0 %v577
        %609 = vmatpush1.msra.mxu0 %v576
        %610 = vmatprep.subr.mxu0 %v579
        %611 = vmatpush1.msra.mxu0 %v578
        %612 = vmatprep.subr.mxu0 %v581
        %613 = vmatpush1.msra.mxu0 %v580
        %614 = vmatprep.subr.mxu0 %v583
        %615 = vmatpush1.msra.mxu0 %v582
        %616 = vmatprep.subr.mxu0 %v585
        %617 = vmatpush1.msra.mxu0 %v584
        %618 = vmatprep.subr.mxu0 %v587
        %619 = vmatpush1.msra.mxu0 %v586
        %620 = vmatprep.subr.mxu0 %v589
        %621 = vmatpush1.msra.mxu0 %v588
        %622 = vmatprep.subr.mxu0 %v591
        %623 = vmatpush1.msra.mxu0 %v590
        %624 = vmatprep.subr.mxu0 0.0
        %625 = vmatpush1.msra.mxu0 0.0
        %626 = vmatprep.subr.mxu0 0.0
        %627 = vmatpush1.msra.mxu0 0.0
        %628 = vmatprep.subr.mxu0 0.0
        %629 = vmatpush1.msra.mxu0 0.0
        %630 = vmatprep.subr.mxu0 0.0
        %631 = vmatpush1.msra.mxu0 0.0
        %632 = vmatprep.subr.mxu0 0.0
        %633 = vmatpush1.msra.mxu0 0.0
        %634 = vmatprep.subr.mxu0 0.0
        %635 = vmatpush1.msra.mxu0 0.0
        %636 = vmatprep.subr.mxu0 0.0
        %637 = vmatpush1.msra.mxu0 0.0
        %638 = vmatprep.subr.mxu0 0.0
        %639 = vmatpush1.msra.mxu0 0.0
        %640 = vmatprep.subr.mxu0 0.0
        %641 = vmatpush1.msra.mxu0 0.0
        %642 = vmatprep.subr.mxu0 0.0
        %643 = vmatpush1.msra.mxu0 0.0
        %644 = vmatprep.subr.mxu0 0.0
        %645 = vmatpush1.msra.mxu0 0.0
        %646 = vmatprep.subr.mxu0 0.0
        %647 = vmatpush1.msra.mxu0 0.0
        %648 = vmatprep.subr.mxu0 0.0
        %649 = vmatpush1.msra.mxu0 0.0
        %650 = vmatprep.subr.mxu0 0.0
        %651 = vmatpush1.msra.mxu0 0.0
        %652 = vmatprep.subr.mxu0 0.0
        %653 = vmatpush1.msra.mxu0 0.0
        %654 = vmatprep.subr.mxu0 0.0
        %655 = vmatpush1.msra.mxu0 0.0
        %656 = vmatprep.mubr.f32.mxu0 0.0
        %657 = vmatmul.mubr.f32.gmra.mrb[0].mxu0 %v496
        %v658 = vpop.f32.mrb[0].mxu0
        %v659 = vadd.f32 0.0, %v658
        %v660 = vpop.f32.mrb[0].mxu0
        %v661 = vadd.f32 0.0, %v660
        %662 = vmatprep.mubr.f32.mxu0 0.0
        %663 = vmatmul.mubr.f32.gmra.mrb[0].mxu0 %v497
        %v664 = vpop.f32.mrb[0].mxu0
        %v665 = vadd.f32 0.0, %v664
        %v666 = vpop.f32.mrb[0].mxu0
        %v667 = vadd.f32 0.0, %v666
        %668 = vmatprep.mubr.f32.mxu0 0.0
        %669 = vmatmul.mubr.f32.gmra.mrb[0].mxu0 %v498
        %v670 = vpop.f32.mrb[0].mxu0
        %v671 = vadd.f32 0.0, %v670
        %v672 = vpop.f32.mrb[0].mxu0
        %v673 = vadd.f32 0.0, %v672
        %674 = vmatprep.mubr.f32.mxu0 0.0
        %675 = vmatmul.mubr.f32.gmra.mrb[0].mxu0 %v499
        %v676 = vpop.f32.mrb[0].mxu0
        %v677 = vadd.f32 0.0, %v676
        %v678 = vpop.f32.mrb[0].mxu0
        %v679 = vadd.f32 0.0, %v678
        %680 = vmatprep.mubr.f32.mxu0 0.0
        %681 = vmatmul.mubr.f32.gmra.mrb[0].mxu0 %v500
        %v682 = vpop.f32.mrb[0].mxu0
        %v683 = vadd.f32 0.0, %v682
        %v684 = vpop.f32.mrb[0].mxu0
        %v685 = vadd.f32 0.0, %v684
        %686 = vmatprep.mubr.f32.mxu0 0.0
        %687 = vmatmul.mubr.f32.gmra.mrb[0].mxu0 %v501
        %v688 = vpop.f32.mrb[0].mxu0
        %v689 = vadd.f32 0.0, %v688
        %v690 = vpop.f32.mrb[0].mxu0
        %v691 = vadd.f32 0.0, %v690
        %692 = vmatprep.mubr.f32.mxu0 0.0
        %693 = vmatmul.mubr.f32.gmra.mrb[0].mxu0 %v502
        %v694 = vpop.f32.mrb[0].mxu0
        %v695 = vadd.f32 0.0, %v694
        %v696 = vpop.f32.mrb[0].mxu0
        %v697 = vadd.f32 0.0, %v696
        %698 = vmatprep.mubr.f32.mxu0 0.0
        %699 = vmatmul.mubr.f32.gmra.mrb[0].mxu0 %v503
        %v700 = vpop.f32.mrb[0].mxu0
        %v701 = vadd.f32 0.0, %v700
        %v702 = vpop.f32.mrb[0].mxu0
        %v703 = vadd.f32 0.0, %v702
        %704 = vmatprep.mubr.f32.mxu0 0.0
        %705 = vmatmul.mubr.f32.gmra.mrb[0].mxu0 %v504
        %v706 = vpop.f32.mrb[0].mxu0
        %v707 = vadd.f32 0.0, %v706
        %v708 = vpop.f32.mrb[0].mxu0
        %v709 = vadd.f32 0.0, %v708
        %710 = vmatprep.mubr.f32.mxu0 0.0
        %711 = vmatmul.mubr.f32.gmra.mrb[0].mxu0 %v505
        %v712 = vpop.f32.mrb[0].mxu0
        %v713 = vadd.f32 0.0, %v712
        %v714 = vpop.f32.mrb[0].mxu0
        %v715 = vadd.f32 0.0, %v714
        %716 = vmatprep.mubr.f32.mxu0 0.0
        %717 = vmatmul.mubr.f32.gmra.mrb[0].mxu0 %v506
        %v718 = vpop.f32.mrb[0].mxu0
        %v719 = vadd.f32 0.0, %v718
        %v720 = vpop.f32.mrb[0].mxu0
        %v721 = vadd.f32 0.0, %v720
        %722 = vmatprep.mubr.f32.mxu0 0.0
        %723 = vmatmul.mubr.f32.gmra.mrb[0].mxu0 %v507
        %v724 = vpop.f32.mrb[0].mxu0
        %v725 = vadd.f32 0.0, %v724
        %v726 = vpop.f32.mrb[0].mxu0
        %v727 = vadd.f32 0.0, %v726
        %728 = vmatprep.mubr.f32.mxu0 0.0
        %729 = vmatmul.mubr.f32.gmra.mrb[0].mxu0 %v508
        %v730 = vpop.f32.mrb[0].mxu0
        %v731 = vadd.f32 0.0, %v730
        %v732 = vpop.f32.mrb[0].mxu0
        %v733 = vadd.f32 0.0, %v732
        %734 = vmatprep.mubr.f32.mxu0 0.0
        %735 = vmatmul.mubr.f32.gmra.mrb[0].mxu0 %v509
        %v736 = vpop.f32.mrb[0].mxu0
        %v737 = vadd.f32 0.0, %v736
        %v738 = vpop.f32.mrb[0].mxu0
        %v739 = vadd.f32 0.0, %v738
        %740 = vmatprep.mubr.f32.mxu0 0.0
        %741 = vmatmul.mubr.f32.gmra.mrb[0].mxu0 %v510
        %v742 = vpop.f32.mrb[0].mxu0
        %v743 = vadd.f32 0.0, %v742
        %v744 = vpop.f32.mrb[0].mxu0
        %v745 = vadd.f32 0.0, %v744
        %746 = vmatprep.mubr.f32.mxu0 0.0
        %747 = vmatmul.mubr.f32.gmra.mrb[0].mxu0 %v511
        %v748 = vpop.f32.mrb[0].mxu0
        %v749 = vadd.f32 0.0, %v748
        %v750 = vpop.f32.mrb[0].mxu0
        %v751 = vadd.f32 0.0, %v750
        %752 = vmatprep.mubr.f32.mxu0 0.0
        %753 = vmatmul.mubr.f32.gmra.mrb[0].mxu0 %v512
        %v754 = vpop.f32.mrb[0].mxu0
        %v755 = vadd.f32 0.0, %v754
        %v756 = vpop.f32.mrb[0].mxu0
        %v757 = vadd.f32 0.0, %v756
        %758 = vmatprep.mubr.f32.mxu0 0.0
        %759 = vmatmul.mubr.f32.gmra.mrb[0].mxu0 %v513
        %v760 = vpop.f32.mrb[0].mxu0
        %v761 = vadd.f32 0.0, %v760
        %v762 = vpop.f32.mrb[0].mxu0
        %v763 = vadd.f32 0.0, %v762
        %764 = vmatprep.mubr.f32.mxu0 0.0
        %765 = vmatmul.mubr.f32.gmra.mrb[0].mxu0 %v514
        %v766 = vpop.f32.mrb[0].mxu0
        %v767 = vadd.f32 0.0, %v766
        %v768 = vpop.f32.mrb[0].mxu0
        %v769 = vadd.f32 0.0, %v768
        %770 = vmatprep.mubr.f32.mxu0 0.0
        %771 = vmatmul.mubr.f32.gmra.mrb[0].mxu0 %v515
        %v772 = vpop.f32.mrb[0].mxu0
        %v773 = vadd.f32 0.0, %v772
        %v774 = vpop.f32.mrb[0].mxu0
        %v775 = vadd.f32 0.0, %v774
        %776 = vmatprep.mubr.f32.mxu0 0.0
        %777 = vmatmul.mubr.f32.gmra.mrb[0].mxu0 %v516
        %v778 = vpop.f32.mrb[0].mxu0
        %v779 = vadd.f32 0.0, %v778
        %v780 = vpop.f32.mrb[0].mxu0
        %v781 = vadd.f32 0.0, %v780
        %782 = vmatprep.mubr.f32.mxu0 0.0
        %783 = vmatmul.mubr.f32.gmra.mrb[0].mxu0 %v517
        %v784 = vpop.f32.mrb[0].mxu0
        %v785 = vadd.f32 0.0, %v784
        %v786 = vpop.f32.mrb[0].mxu0
        %v787 = vadd.f32 0.0, %v786
        %788 = vmatprep.mubr.f32.mxu0 0.0
        %789 = vmatmul.mubr.f32.gmra.mrb[0].mxu0 %v518
        %v790 = vpop.f32.mrb[0].mxu0
        %v791 = vadd.f32 0.0, %v790
        %v792 = vpop.f32.mrb[0].mxu0
        %v793 = vadd.f32 0.0, %v792
        %794 = vmatprep.mubr.f32.mxu0 0.0
        %795 = vmatmul.mubr.f32.gmra.mrb[0].mxu0 %v519
        %v796 = vpop.f32.mrb[0].mxu0
        %v797 = vadd.f32 0.0, %v796
        %v798 = vpop.f32.mrb[0].mxu0
        %v799 = vadd.f32 0.0, %v798
        %800 = vmatprep.mubr.f32.mxu0 0.0
        %801 = vmatmul.mubr.f32.gmra.mrb[0].mxu0 %v520
        %v802 = vpop.f32.mrb[0].mxu0
        %v803 = vadd.f32 0.0, %v802
        %v804 = vpop.f32.mrb[0].mxu0
        %v805 = vadd.f32 0.0, %v804
        %806 = vmatprep.mubr.f32.mxu0 0.0
        %807 = vmatmul.mubr.f32.gmra.mrb[0].mxu0 %v521
        %v808 = vpop.f32.mrb[0].mxu0
        %v809 = vadd.f32 0.0, %v808
        %v810 = vpop.f32.mrb[0].mxu0
        %v811 = vadd.f32 0.0, %v810
        %812 = vmatprep.mubr.f32.mxu0 0.0
        %813 = vmatmul.mubr.f32.gmra.mrb[0].mxu0 %v522
        %v814 = vpop.f32.mrb[0].mxu0
        %v815 = vadd.f32 0.0, %v814
        %v816 = vpop.f32.mrb[0].mxu0
        %v817 = vadd.f32 0.0, %v816
        %818 = vmatprep.mubr.f32.mxu0 0.0
        %819 = vmatmul.mubr.f32.gmra.mrb[0].mxu0 %v523
        %v820 = vpop.f32.mrb[0].mxu0
        %v821 = vadd.f32 0.0, %v820
        %v822 = vpop.f32.mrb[0].mxu0
        %v823 = vadd.f32 0.0, %v822
        %824 = vmatprep.mubr.f32.mxu0 0.0
        %825 = vmatmul.mubr.f32.gmra.mrb[0].mxu0 %v524
        %v826 = vpop.f32.mrb[0].mxu0
        %v827 = vadd.f32 0.0, %v826
        %v828 = vpop.f32.mrb[0].mxu0
        %v829 = vadd.f32 0.0, %v828
        %830 = vmatprep.mubr.f32.mxu0 0.0
        %831 = vmatmul.mubr.f32.gmra.mrb[0].mxu0 %v525
        %v832 = vpop.f32.mrb[0].mxu0
        %v833 = vadd.f32 0.0, %v832
        %v834 = vpop.f32.mrb[0].mxu0
        %v835 = vadd.f32 0.0, %v834
        %836 = vmatprep.mubr.f32.mxu0 0.0
        %837 = vmatmul.mubr.f32.gmra.mrb[0].mxu0 %v526
        %v838 = vpop.f32.mrb[0].mxu0
        %v839 = vadd.f32 0.0, %v838
        %v840 = vpop.f32.mrb[0].mxu0
        %v841 = vadd.f32 0.0, %v840
        %842 = vmatprep.mubr.f32.mxu0 0.0
        %843 = vmatmul.mubr.f32.gmra.mrb[0].mxu0 %v527
        %v844 = vpop.f32.mrb[0].mxu0
        %v845 = vadd.f32 0.0, %v844
        %v846 = vpop.f32.mrb[0].mxu0
        %v847 = vadd.f32 0.0, %v846
        %848 = vmatprep.mubr.f32.mxu0 0.0
        %849 = vmatmul.mubr.f32.gmra.mrb[0].mxu0 %v528
        %v850 = vpop.f32.mrb[0].mxu0
        %v851 = vadd.f32 0.0, %v850
        %v852 = vpop.f32.mrb[0].mxu0
        %v853 = vadd.f32 0.0, %v852
        %854 = vmatprep.mubr.f32.mxu0 0.0
        %855 = vmatmul.mubr.f32.gmra.mrb[0].mxu0 %v529
        %v856 = vpop.f32.mrb[0].mxu0
        %v857 = vadd.f32 0.0, %v856
        %v858 = vpop.f32.mrb[0].mxu0
        %v859 = vadd.f32 0.0, %v858
        %860 = vmatprep.mubr.f32.mxu0 0.0
        %861 = vmatmul.mubr.f32.gmra.mrb[0].mxu0 %v530
        %v862 = vpop.f32.mrb[0].mxu0
        %v863 = vadd.f32 0.0, %v862
        %v864 = vpop.f32.mrb[0].mxu0
        %v865 = vadd.f32 0.0, %v864
        %866 = vmatprep.mubr.f32.mxu0 0.0
        %867 = vmatmul.mubr.f32.gmra.mrb[0].mxu0 %v531
        %v868 = vpop.f32.mrb[0].mxu0
        %v869 = vadd.f32 0.0, %v868
        %v870 = vpop.f32.mrb[0].mxu0
        %v871 = vadd.f32 0.0, %v870
        %872 = vmatprep.mubr.f32.mxu0 0.0
        %873 = vmatmul.mubr.f32.gmra.mrb[0].mxu0 %v532
        %v874 = vpop.f32.mrb[0].mxu0
        %v875 = vadd.f32 0.0, %v874
        %v876 = vpop.f32.mrb[0].mxu0
        %v877 = vadd.f32 0.0, %v876
        %878 = vmatprep.mubr.f32.mxu0 0.0
        %879 = vmatmul.mubr.f32.gmra.mrb[0].mxu0 %v533
        %v880 = vpop.f32.mrb[0].mxu0
        %v881 = vadd.f32 0.0, %v880
        %v882 = vpop.f32.mrb[0].mxu0
        %v883 = vadd.f32 0.0, %v882
        %884 = vmatprep.mubr.f32.mxu0 0.0
        %885 = vmatmul.mubr.f32.gmra.mrb[0].mxu0 %v534
        %v886 = vpop.f32.mrb[0].mxu0
        %v887 = vadd.f32 0.0, %v886
        %v888 = vpop.f32.mrb[0].mxu0
        %v889 = vadd.f32 0.0, %v888
        %890 = vmatprep.mubr.f32.mxu0 0.0
        %891 = vmatmul.mubr.f32.gmra.mrb[0].mxu0 %v535
        %v892 = vpop.f32.mrb[0].mxu0
        %v893 = vadd.f32 0.0, %v892
        %v894 = vpop.f32.mrb[0].mxu0
        %v895 = vadd.f32 0.0, %v894
        %896 = vmatprep.mubr.f32.mxu0 0.0
        %897 = vmatmul.mubr.f32.gmra.mrb[0].mxu0 %v536
        %v898 = vpop.f32.mrb[0].mxu0
        %v899 = vadd.f32 0.0, %v898
        %v900 = vpop.f32.mrb[0].mxu0
        %v901 = vadd.f32 0.0, %v900
        %902 = vmatprep.mubr.f32.mxu0 0.0
        %903 = vmatmul.mubr.f32.gmra.mrb[0].mxu0 %v537
        %v904 = vpop.f32.mrb[0].mxu0
        %v905 = vadd.f32 0.0, %v904
        %v906 = vpop.f32.mrb[0].mxu0
        %v907 = vadd.f32 0.0, %v906
        %908 = vmatprep.mubr.f32.mxu0 0.0
        %909 = vmatmul.mubr.f32.gmra.mrb[0].mxu0 %v538
        %v910 = vpop.f32.mrb[0].mxu0
        %v911 = vadd.f32 0.0, %v910
        %v912 = vpop.f32.mrb[0].mxu0
        %v913 = vadd.f32 0.0, %v912
        %914 = vmatprep.mubr.f32.mxu0 0.0
        %915 = vmatmul.mubr.f32.gmra.mrb[0].mxu0 %v539
        %v916 = vpop.f32.mrb[0].mxu0
        %v917 = vadd.f32 0.0, %v916
        %v918 = vpop.f32.mrb[0].mxu0
        %v919 = vadd.f32 0.0, %v918
        %920 = vmatprep.mubr.f32.mxu0 0.0
        %921 = vmatmul.mubr.f32.gmra.mrb[0].mxu0 %v540
        %v922 = vpop.f32.mrb[0].mxu0
        %v923 = vadd.f32 0.0, %v922
        %v924 = vpop.f32.mrb[0].mxu0
        %v925 = vadd.f32 0.0, %v924
        %926 = vmatprep.mubr.f32.mxu0 0.0
        %927 = vmatmul.mubr.f32.gmra.mrb[0].mxu0 %v541
        %v928 = vpop.f32.mrb[0].mxu0
        %v929 = vadd.f32 0.0, %v928
        %v930 = vpop.f32.mrb[0].mxu0
        %v931 = vadd.f32 0.0, %v930
        %932 = vmatprep.mubr.f32.mxu0 0.0
        %933 = vmatmul.mubr.f32.gmra.mrb[0].mxu0 %v542
        %v934 = vpop.f32.mrb[0].mxu0
        %v935 = vadd.f32 0.0, %v934
        %v936 = vpop.f32.mrb[0].mxu0
        %v937 = vadd.f32 0.0, %v936
        %938 = vmatprep.mubr.f32.mxu0 0.0
        %939 = vmatmul.mubr.f32.gmra.mrb[0].mxu0 %v543
        %v940 = vpop.f32.mrb[0].mxu0
        %v941 = vadd.f32 0.0, %v940
        %v942 = vpop.f32.mrb[0].mxu0
        %v943 = vadd.f32 0.0, %v942
        %944 = vmatprep.mubr.f32.mxu0 0.0
        %945 = vmatmul.mubr.f32.gmra.mrb[0].mxu0 %v544
        %v946 = vpop.f32.mrb[0].mxu0
        %v947 = vadd.f32 0.0, %v946
        %v948 = vpop.f32.mrb[0].mxu0
        %v949 = vadd.f32 0.0, %v948
        %950 = vmatprep.mubr.f32.mxu0 0.0
        %951 = vmatmul.mubr.f32.gmra.mrb[0].mxu0 %v545
        %v952 = vpop.f32.mrb[0].mxu0
        %v953 = vadd.f32 0.0, %v952
        %v954 = vpop.f32.mrb[0].mxu0
        %v955 = vadd.f32 0.0, %v954
        %956 = vmatprep.mubr.f32.mxu0 0.0
        %957 = vmatmul.mubr.f32.gmra.mrb[0].mxu0 %v546
        %v958 = vpop.f32.mrb[0].mxu0
        %v959 = vadd.f32 0.0, %v958
        %v960 = vpop.f32.mrb[0].mxu0
        %v961 = vadd.f32 0.0, %v960
        %962 = vmatprep.mubr.f32.mxu0 0.0
        %963 = vmatmul.mubr.f32.gmra.mrb[0].mxu0 %v547
        %v964 = vpop.f32.mrb[0].mxu0
        %v965 = vadd.f32 0.0, %v964
        %v966 = vpop.f32.mrb[0].mxu0
        %v967 = vadd.f32 0.0, %v966
        %968 = vmatprep.mubr.f32.mxu0 0.0
        %969 = vmatmul.mubr.f32.gmra.mrb[0].mxu0 %v548
        %v970 = vpop.f32.mrb[0].mxu0
        %v971 = vadd.f32 0.0, %v970
        %v972 = vpop.f32.mrb[0].mxu0
        %v973 = vadd.f32 0.0, %v972
        %974 = vmatprep.mubr.f32.mxu0 0.0
        %975 = vmatmul.mubr.f32.gmra.mrb[0].mxu0 %v549
        %v976 = vpop.f32.mrb[0].mxu0
        %v977 = vadd.f32 0.0, %v976
        %v978 = vpop.f32.mrb[0].mxu0
        %v979 = vadd.f32 0.0, %v978
        %980 = vmatprep.mubr.f32.mxu0 0.0
        %981 = vmatmul.mubr.f32.gmra.mrb[0].mxu0 %v550
        %v982 = vpop.f32.mrb[0].mxu0
        %v983 = vadd.f32 0.0, %v982
        %v984 = vpop.f32.mrb[0].mxu0
        %v985 = vadd.f32 0.0, %v984
        %986 = vmatprep.mubr.f32.mxu0 0.0
        %987 = vmatmul.mubr.f32.gmra.mrb[0].mxu0 %v551
        %v988 = vpop.f32.mrb[0].mxu0
        %v989 = vadd.f32 0.0, %v988
        %v990 = vpop.f32.mrb[0].mxu0
        %v991 = vadd.f32 0.0, %v990
        %992 = vmatprep.mubr.f32.mxu0 0.0
        %993 = vmatmul.mubr.f32.gmra.mrb[0].mxu0 %v552
        %v994 = vpop.f32.mrb[0].mxu0
        %v995 = vadd.f32 0.0, %v994
        %v996 = vpop.f32.mrb[0].mxu0
        %v997 = vadd.f32 0.0, %v996
        %998 = vmatprep.mubr.f32.mxu0 0.0
        %999 = vmatmul.mubr.f32.gmra.mrb[0].mxu0 %v553
        %v1000 = vpop.f32.mrb[0].mxu0
        %v1001 = vadd.f32 0.0, %v1000
        %v1002 = vpop.f32.mrb[0].mxu0
        %v1003 = vadd.f32 0.0, %v1002
        %1004 = vmatprep.mubr.f32.mxu0 0.0
        %1005 = vmatmul.mubr.f32.gmra.mrb[0].mxu0 %v554
        %v1006 = vpop.f32.mrb[0].mxu0
        %v1007 = vadd.f32 0.0, %v1006
        %v1008 = vpop.f32.mrb[0].mxu0
        %v1009 = vadd.f32 0.0, %v1008
        %1010 = vmatprep.mubr.f32.mxu0 0.0
        %1011 = vmatmul.mubr.f32.gmra.mrb[0].mxu0 %v555
        %v1012 = vpop.f32.mrb[0].mxu0
        %v1013 = vadd.f32 0.0, %v1012
        %v1014 = vpop.f32.mrb[0].mxu0
        %v1015 = vadd.f32 0.0, %v1014
        %1016 = vmatprep.mubr.f32.mxu0 0.0
        %1017 = vmatmul.mubr.f32.gmra.mrb[0].mxu0 %v556
        %v1018 = vpop.f32.mrb[0].mxu0
        %v1019 = vadd.f32 0.0, %v1018
        %v1020 = vpop.f32.mrb[0].mxu0
        %v1021 = vadd.f32 0.0, %v1020
        %1022 = vmatprep.mubr.f32.mxu0 0.0
        %1023 = vmatmul.mubr.f32.gmra.mrb[0].mxu0 %v557
        %v1024 = vpop.f32.mrb[0].mxu0
        %v1025 = vadd.f32 0.0, %v1024
        %v1026 = vpop.f32.mrb[0].mxu0
        %v1027 = vadd.f32 0.0, %v1026
        %1028 = vmatprep.mubr.f32.mxu0 0.0
        %1029 = vmatmul.mubr.f32.gmra.mrb[0].mxu0 %v558
        %v1030 = vpop.f32.mrb[0].mxu0
        %v1031 = vadd.f32 0.0, %v1030
        %v1032 = vpop.f32.mrb[0].mxu0
        %v1033 = vadd.f32 0.0, %v1032
        %1034 = vmatprep.mubr.f32.mxu0 0.0
        %1035 = vmatmul.mubr.f32.gmra.mrb[0].mxu0 %v559
        %v1036 = vpop.f32.mrb[0].mxu0
        %v1037 = vadd.f32 0.0, %v1036
        %v1038 = vpop.f32.mrb[0].mxu0
        %v1039 = vadd.f32 0.0, %v1038
        %1040 = vdwg.mxu0
        %v1041 = vadd.f32 %v368, %v659
        %v1042 = vadd.f32 %v369, %v661
        %v1043 = vadd.f32 %v370, %v665
        %v1044 = vadd.f32 %v371, %v667
        %v1045 = vadd.f32 %v372, %v671
        %v1046 = vadd.f32 %v373, %v673
        %v1047 = vadd.f32 %v374, %v677
        %v1048 = vadd.f32 %v375, %v679
        %v1049 = vadd.f32 %v376, %v683
        %v1050 = vadd.f32 %v377, %v685
        %v1051 = vadd.f32 %v378, %v689
        %v1052 = vadd.f32 %v379, %v691
        %v1053 = vadd.f32 %v380, %v695
        %v1054 = vadd.f32 %v381, %v697
        %v1055 = vadd.f32 %v382, %v701
        %v1056 = vadd.f32 %v383, %v703
        %v1057 = vadd.f32 %v384, %v707
        %v1058 = vadd.f32 %v385, %v709
        %v1059 = vadd.f32 %v386, %v713
        %v1060 = vadd.f32 %v387, %v715
        %v1061 = vadd.f32 %v388, %v719
        %v1062 = vadd.f32 %v389, %v721
        %v1063 = vadd.f32 %v390, %v725
        %v1064 = vadd.f32 %v391, %v727
        %v1065 = vadd.f32 %v392, %v731
        %v1066 = vadd.f32 %v393, %v733
        %v1067 = vadd.f32 %v394, %v737
        %v1068 = vadd.f32 %v395, %v739
        %v1069 = vadd.f32 %v396, %v743
        %v1070 = vadd.f32 %v397, %v745
        %v1071 = vadd.f32 %v398, %v749
        %v1072 = vadd.f32 %v399, %v751
        %v1073 = vadd.f32 %v400, %v755
        %v1074 = vadd.f32 %v401, %v757
        %v1075 = vadd.f32 %v402, %v761
        %v1076 = vadd.f32 %v403, %v763
        %v1077 = vadd.f32 %v404, %v767
        %v1078 = vadd.f32 %v405, %v769
        %v1079 = vadd.f32 %v406, %v773
        %v1080 = vadd.f32 %v407, %v775
        %v1081 = vadd.f32 %v408, %v779
        %v1082 = vadd.f32 %v409, %v781
        %v1083 = vadd.f32 %v410, %v785
        %v1084 = vadd.f32 %v411, %v787
        %v1085 = vadd.f32 %v412, %v791
        %v1086 = vadd.f32 %v413, %v793
        %v1087 = vadd.f32 %v414, %v797
        %v1088 = vadd.f32 %v415, %v799
        %v1089 = vadd.f32 %v416, %v803
        %v1090 = vadd.f32 %v417, %v805
        %v1091 = vadd.f32 %v418, %v809
        %v1092 = vadd.f32 %v419, %v811
        %v1093 = vadd.f32 %v420, %v815
        %v1094 = vadd.f32 %v421, %v817
        %v1095 = vadd.f32 %v422, %v821
        %v1096 = vadd.f32 %v423, %v823
        %v1097 = vadd.f32 %v424, %v827
        %v1098 = vadd.f32 %v425, %v829
        %v1099 = vadd.f32 %v426, %v833
        %v1100 = vadd.f32 %v427, %v835
        %v1101 = vadd.f32 %v428, %v839
        %v1102 = vadd.f32 %v429, %v841
        %v1103 = vadd.f32 %v430, %v845
        %v1104 = vadd.f32 %v431, %v847
        %v1105 = vadd.f32 %v432, %v851
        %v1106 = vadd.f32 %v433, %v853
        %v1107 = vadd.f32 %v434, %v857
        %v1108 = vadd.f32 %v435, %v859
        %v1109 = vadd.f32 %v436, %v863
        %v1110 = vadd.f32 %v437, %v865
        %v1111 = vadd.f32 %v438, %v869
        %v1112 = vadd.f32 %v439, %v871
        %v1113 = vadd.f32 %v440, %v875
        %v1114 = vadd.f32 %v441, %v877
        %v1115 = vadd.f32 %v442, %v881
        %v1116 = vadd.f32 %v443, %v883
        %v1117 = vadd.f32 %v444, %v887
        %v1118 = vadd.f32 %v445, %v889
        %v1119 = vadd.f32 %v446, %v893
        %v1120 = vadd.f32 %v447, %v895
        %v1121 = vadd.f32 %v448, %v899
        %v1122 = vadd.f32 %v449, %v901
        %v1123 = vadd.f32 %v450, %v905
        %v1124 = vadd.f32 %v451, %v907
        %v1125 = vadd.f32 %v452, %v911
        %v1126 = vadd.f32 %v453, %v913
        %v1127 = vadd.f32 %v454, %v917
        %v1128 = vadd.f32 %v455, %v919
        %v1129 = vadd.f32 %v456, %v923
        %v1130 = vadd.f32 %v457, %v925
        %v1131 = vadd.f32 %v458, %v929
        %v1132 = vadd.f32 %v459, %v931
        %v1133 = vadd.f32 %v460, %v935
        %v1134 = vadd.f32 %v461, %v937
        %v1135 = vadd.f32 %v462, %v941
        %v1136 = vadd.f32 %v463, %v943
        %v1137 = vadd.f32 %v464, %v947
        %v1138 = vadd.f32 %v465, %v949
        %v1139 = vadd.f32 %v466, %v953
        %v1140 = vadd.f32 %v467, %v955
        %v1141 = vadd.f32 %v468, %v959
        %v1142 = vadd.f32 %v469, %v961
        %v1143 = vadd.f32 %v470, %v965
        %v1144 = vadd.f32 %v471, %v967
        %v1145 = vadd.f32 %v472, %v971
        %v1146 = vadd.f32 %v473, %v973
        %v1147 = vadd.f32 %v474, %v977
        %v1148 = vadd.f32 %v475, %v979
        %v1149 = vadd.f32 %v476, %v983
        %v1150 = vadd.f32 %v477, %v985
        %v1151 = vadd.f32 %v478, %v989
        %v1152 = vadd.f32 %v479, %v991
        %v1153 = vadd.f32 %v480, %v995
        %v1154 = vadd.f32 %v481, %v997
        %v1155 = vadd.f32 %v482, %v1001
        %v1156 = vadd.f32 %v483, %v1003
        %v1157 = vadd.f32 %v484, %v1007
        %v1158 = vadd.f32 %v485, %v1009
        %v1159 = vadd.f32 %v486, %v1013
        %v1160 = vadd.f32 %v487, %v1015
        %v1161 = vadd.f32 %v488, %v1019
        %v1162 = vadd.f32 %v489, %v1021
        %v1163 = vadd.f32 %v490, %v1025
        %v1164 = vadd.f32 %v491, %v1027
        %v1165 = vadd.f32 %v492, %v1031
        %v1166 = vadd.f32 %v493, %v1033
        %v1167 = vadd.f32 %v494, %v1037
        %v1168 = vadd.f32 %v495, %v1039
        %1169 = vst [vmem:[#allocation2] sm:$0xff] %v1041
        %1170 = vst [vmem:[#allocation2 + $0x8] sm:$0xff] %v1042
        %1171 = vst [vmem:[#allocation2 + $0x10] sm:$0xff] %v1043
        %1172 = vst [vmem:[#allocation2 + $0x18] sm:$0xff] %v1044
        %1173 = vst [vmem:[#allocation2 + $0x20] sm:$0xff] %v1045
        %1174 = vst [vmem:[#allocation2 + $0x28] sm:$0xff] %v1046
        %1175 = vst [vmem:[#allocation2 + $0x30] sm:$0xff] %v1047
        %1176 = vst [vmem:[#allocation2 + $0x38] sm:$0xff] %v1048
        %1177 = vst [vmem:[#allocation2 + $0x40] sm:$0xff] %v1049
        %1178 = vst [vmem:[#allocation2 + $0x48] sm:$0xff] %v1050
        %1179 = vst [vmem:[#allocation2 + $0x50] sm:$0xff] %v1051
        %1180 = vst [vmem:[#allocation2 + $0x58] sm:$0xff] %v1052
        %1181 = vst [vmem:[#allocation2 + $0x60] sm:$0xff] %v1053
        %1182 = vst [vmem:[#allocation2 + $0x68] sm:$0xff] %v1054
        %1183 = vst [vmem:[#allocation2 + $0x70] sm:$0xff] %v1055
        %1184 = vst [vmem:[#allocation2 + $0x78] sm:$0xff] %v1056
        %1185 = vst [vmem:[#allocation2 + $0x80] sm:$0xff] %v1057
        %1186 = vst [vmem:[#allocation2 + $0x88] sm:$0xff] %v1058
        %1187 = vst [vmem:[#allocation2 + $0x90] sm:$0xff] %v1059
        %1188 = vst [vmem:[#allocation2 + $0x98] sm:$0xff] %v1060
        %1189 = vst [vmem:[#allocation2 + $0xa0] sm:$0xff] %v1061
        %1190 = vst [vmem:[#allocation2 + $0xa8] sm:$0xff] %v1062
        %1191 = vst [vmem:[#allocation2 + $0xb0] sm:$0xff] %v1063
        %1192 = vst [vmem:[#allocation2 + $0xb8] sm:$0xff] %v1064
        %1193 = vst [vmem:[#allocation2 + $0xc0] sm:$0xff] %v1065
        %1194 = vst [vmem:[#allocation2 + $0xc8] sm:$0xff] %v1066
        %1195 = vst [vmem:[#allocation2 + $0xd0] sm:$0xff] %v1067
        %1196 = vst [vmem:[#allocation2 + $0xd8] sm:$0xff] %v1068
        %1197 = vst [vmem:[#allocation2 + $0xe0] sm:$0xff] %v1069
        %1198 = vst [vmem:[#allocation2 + $0xe8] sm:$0xff] %v1070
        %1199 = vst [vmem:[#allocation2 + $0xf0] sm:$0xff] %v1071
        %1200 = vst [vmem:[#allocation2 + $0xf8] sm:$0xff] %v1072
        %1201 = vst [vmem:[#allocation2 + $0x100] sm:$0xff] %v1073
        %1202 = vst [vmem:[#allocation2 + $0x108] sm:$0xff] %v1074
        %1203 = vst [vmem:[#allocation2 + $0x110] sm:$0xff] %v1075
        %1204 = vst [vmem:[#allocation2 + $0x118] sm:$0xff] %v1076
        %1205 = vst [vmem:[#allocation2 + $0x120] sm:$0xff] %v1077
        %1206 = vst [vmem:[#allocation2 + $0x128] sm:$0xff] %v1078
        %1207 = vst [vmem:[#allocation2 + $0x130] sm:$0xff] %v1079
        %1208 = vst [vmem:[#allocation2 + $0x138] sm:$0xff] %v1080
        %1209 = vst [vmem:[#allocation2 + $0x140] sm:$0xff] %v1081
        %1210 = vst [vmem:[#allocation2 + $0x148] sm:$0xff] %v1082
        %1211 = vst [vmem:[#allocation2 + $0x150] sm:$0xff] %v1083
        %1212 = vst [vmem:[#allocation2 + $0x158] sm:$0xff] %v1084
        %1213 = vst [vmem:[#allocation2 + $0x160] sm:$0xff] %v1085
        %1214 = vst [vmem:[#allocation2 + $0x168] sm:$0xff] %v1086
        %1215 = vst [vmem:[#allocation2 + $0x170] sm:$0xff] %v1087
        %1216 = vst [vmem:[#allocation2 + $0x178] sm:$0xff] %v1088
        %1217 = vst [vmem:[#allocation2 + $0x180] sm:$0xff] %v1089
        %1218 = vst [vmem:[#allocation2 + $0x188] sm:$0xff] %v1090
        %1219 = vst [vmem:[#allocation2 + $0x190] sm:$0xff] %v1091
        %1220 = vst [vmem:[#allocation2 + $0x198] sm:$0xff] %v1092
        %1221 = vst [vmem:[#allocation2 + $0x1a0] sm:$0xff] %v1093
        %1222 = vst [vmem:[#allocation2 + $0x1a8] sm:$0xff] %v1094
        %1223 = vst [vmem:[#allocation2 + $0x1b0] sm:$0xff] %v1095
        %1224 = vst [vmem:[#allocation2 + $0x1b8] sm:$0xff] %v1096
        %1225 = vst [vmem:[#allocation2 + $0x1c0] sm:$0xff] %v1097
        %1226 = vst [vmem:[#allocation2 + $0x1c8] sm:$0xff] %v1098
        %1227 = vst [vmem:[#allocation2 + $0x1d0] sm:$0xff] %v1099
        %1228 = vst [vmem:[#allocation2 + $0x1d8] sm:$0xff] %v1100
        %1229 = vst [vmem:[#allocation2 + $0x1e0] sm:$0xff] %v1101
        %1230 = vst [vmem:[#allocation2 + $0x1e8] sm:$0xff] %v1102
        %1231 = vst [vmem:[#allocation2 + $0x1f0] sm:$0xff] %v1103
        %1232 = vst [vmem:[#allocation2 + $0x1f8] sm:$0xff] %v1104
        %1233 = vst [vmem:[#allocation2 + $0x200] sm:$0xff] %v1105
        %1234 = vst [vmem:[#allocation2 + $0x208] sm:$0xff] %v1106
        %1235 = vst [vmem:[#allocation2 + $0x210] sm:$0xff] %v1107
        %1236 = vst [vmem:[#allocation2 + $0x218] sm:$0xff] %v1108
        %1237 = vst [vmem:[#allocation2 + $0x220] sm:$0xff] %v1109
        %1238 = vst [vmem:[#allocation2 + $0x228] sm:$0xff] %v1110
        %1239 = vst [vmem:[#allocation2 + $0x230] sm:$0xff] %v1111
        %1240 = vst [vmem:[#allocation2 + $0x238] sm:$0xff] %v1112
        %1241 = vst [vmem:[#allocation2 + $0x240] sm:$0xff] %v1113
        %1242 = vst [vmem:[#allocation2 + $0x248] sm:$0xff] %v1114
        %1243 = vst [vmem:[#allocation2 + $0x250] sm:$0xff] %v1115
        %1244 = vst [vmem:[#allocation2 + $0x258] sm:$0xff] %v1116
        %1245 = vst [vmem:[#allocation2 + $0x260] sm:$0xff] %v1117
        %1246 = vst [vmem:[#allocation2 + $0x268] sm:$0xff] %v1118
        %1247 = vst [vmem:[#allocation2 + $0x270] sm:$0xff] %v1119
        %1248 = vst [vmem:[#allocation2 + $0x278] sm:$0xff] %v1120
        %1249 = vst [vmem:[#allocation2 + $0x280] sm:$0xff] %v1121
        %1250 = vst [vmem:[#allocation2 + $0x288] sm:$0xff] %v1122
        %1251 = vst [vmem:[#allocation2 + $0x290] sm:$0xff] %v1123
        %1252 = vst [vmem:[#allocation2 + $0x298] sm:$0xff] %v1124
        %1253 = vst [vmem:[#allocation2 + $0x2a0] sm:$0xff] %v1125
        %1254 = vst [vmem:[#allocation2 + $0x2a8] sm:$0xff] %v1126
        %1255 = vst [vmem:[#allocation2 + $0x2b0] sm:$0xff] %v1127
        %1256 = vst [vmem:[#allocation2 + $0x2b8] sm:$0xff] %v1128
        %1257 = vst [vmem:[#allocation2 + $0x2c0] sm:$0xff] %v1129
        %1258 = vst [vmem:[#allocation2 + $0x2c8] sm:$0xff] %v1130
        %1259 = vst [vmem:[#allocation2 + $0x2d0] sm:$0xff] %v1131
        %1260 = vst [vmem:[#allocation2 + $0x2d8] sm:$0xff] %v1132
        %1261 = vst [vmem:[#allocation2 + $0x2e0] sm:$0xff] %v1133
        %1262 = vst [vmem:[#allocation2 + $0x2e8] sm:$0xff] %v1134
        %1263 = vst [vmem:[#allocation2 + $0x2f0] sm:$0xff] %v1135
        %1264 = vst [vmem:[#allocation2 + $0x2f8] sm:$0xff] %v1136
        %1265 = vst [vmem:[#allocation2 + $0x300] sm:$0xff] %v1137
        %1266 = vst [vmem:[#allocation2 + $0x308] sm:$0xff] %v1138
        %1267 = vst [vmem:[#allocation2 + $0x310] sm:$0xff] %v1139
        %1268 = vst [vmem:[#allocation2 + $0x318] sm:$0xff] %v1140
        %1269 = vst [vmem:[#allocation2 + $0x320] sm:$0xff] %v1141
        %1270 = vst [vmem:[#allocation2 + $0x328] sm:$0xff] %v1142
        %1271 = vst [vmem:[#allocation2 + $0x330] sm:$0xff] %v1143
        %1272 = vst [vmem:[#allocation2 + $0x338] sm:$0xff] %v1144
        %1273 = vst [vmem:[#allocation2 + $0x340] sm:$0xff] %v1145
        %1274 = vst [vmem:[#allocation2 + $0x348] sm:$0xff] %v1146
        %1275 = vst [vmem:[#allocation2 + $0x350] sm:$0xff] %v1147
        %1276 = vst [vmem:[#allocation2 + $0x358] sm:$0xff] %v1148
        %1277 = vst [vmem:[#allocation2 + $0x360] sm:$0xff] %v1149
        %1278 = vst [vmem:[#allocation2 + $0x368] sm:$0xff] %v1150
        %1279 = vst [vmem:[#allocation2 + $0x370] sm:$0xff] %v1151
        %1280 = vst [vmem:[#allocation2 + $0x378] sm:$0xff] %v1152
        %1281 = vst [vmem:[#allocation2 + $0x380] sm:$0xff] %v1153
        %1282 = vst [vmem:[#allocation2 + $0x388] sm:$0xff] %v1154
        %1283 = vst [vmem:[#allocation2 + $0x390] sm:$0xff] %v1155
        %1284 = vst [vmem:[#allocation2 + $0x398] sm:$0xff] %v1156
        %1285 = vst [vmem:[#allocation2 + $0x3a0] sm:$0xff] %v1157
        %1286 = vst [vmem:[#allocation2 + $0x3a8] sm:$0xff] %v1158
        %1287 = vst [vmem:[#allocation2 + $0x3b0] sm:$0xff] %v1159
        %1288 = vst [vmem:[#allocation2 + $0x3b8] sm:$0xff] %v1160
        %1289 = vst [vmem:[#allocation2 + $0x3c0] sm:$0xff] %v1161
        %1290 = vst [vmem:[#allocation2 + $0x3c8] sm:$0xff] %v1162
        %1291 = vst [vmem:[#allocation2 + $0x3d0] sm:$0xff] %v1163
        %1292 = vst [vmem:[#allocation2 + $0x3d8] sm:$0xff] %v1164
        %1293 = vst [vmem:[#allocation2 + $0x3e0] sm:$0xff] %v1165
        %1294 = vst [vmem:[#allocation2 + $0x3e8] sm:$0xff] %v1166
        %1295 = vst [vmem:[#allocation2 + $0x3f0] sm:$0xff] %v1167
        %1296 = vst [vmem:[#allocation2 + $0x3f8] sm:$0xff] %v1168
        // Predicated region
        $region41: #{tpu_custom_call.1} parent=27 // pred_check
          %p1297 = pneg %p236
        $region42: #{tpu_custom_call.1} parent=27 // pred_check_branch
          %1299 = sbr.rel (%p1297) target = $region44
        $region43: #{tpu_custom_call.1} parent=27 // pred_region
          %v1300 = vld [vmem:[#allocation2] sm:$0xff]
          %v1301 = vld [vmem:[#allocation2 + $0x8] sm:$0xff]
          %v1302 = vld [vmem:[#allocation2 + $0x10] sm:$0xff]
          %v1303 = vld [vmem:[#allocation2 + $0x18] sm:$0xff]
          %v1304 = vld [vmem:[#allocation2 + $0x20] sm:$0xff]
          %v1305 = vld [vmem:[#allocation2 + $0x28] sm:$0xff]
          %v1306 = vld [vmem:[#allocation2 + $0x30] sm:$0xff]
          %v1307 = vld [vmem:[#allocation2 + $0x38] sm:$0xff]
          %v1308 = vld [vmem:[#allocation2 + $0x40] sm:$0xff]
          %v1309 = vld [vmem:[#allocation2 + $0x48] sm:$0xff]
          %v1310 = vld [vmem:[#allocation2 + $0x50] sm:$0xff]
          %v1311 = vld [vmem:[#allocation2 + $0x58] sm:$0xff]
          %v1312 = vld [vmem:[#allocation2 + $0x60] sm:$0xff]
          %v1313 = vld [vmem:[#allocation2 + $0x68] sm:$0xff]
          %v1314 = vld [vmem:[#allocation2 + $0x70] sm:$0xff]
          %v1315 = vld [vmem:[#allocation2 + $0x78] sm:$0xff]
          %v1316 = vld [vmem:[#allocation2 + $0x80] sm:$0xff]
          %v1317 = vld [vmem:[#allocation2 + $0x88] sm:$0xff]
          %v1318 = vld [vmem:[#allocation2 + $0x90] sm:$0xff]
          %v1319 = vld [vmem:[#allocation2 + $0x98] sm:$0xff]
          %v1320 = vld [vmem:[#allocation2 + $0xa0] sm:$0xff]
          %v1321 = vld [vmem:[#allocation2 + $0xa8] sm:$0xff]
          %v1322 = vld [vmem:[#allocation2 + $0xb0] sm:$0xff]
          %v1323 = vld [vmem:[#allocation2 + $0xb8] sm:$0xff]
          %v1324 = vld [vmem:[#allocation2 + $0xc0] sm:$0xff]
          %v1325 = vld [vmem:[#allocation2 + $0xc8] sm:$0xff]
          %v1326 = vld [vmem:[#allocation2 + $0xd0] sm:$0xff]
          %v1327 = vld [vmem:[#allocation2 + $0xd8] sm:$0xff]
          %v1328 = vld [vmem:[#allocation2 + $0xe0] sm:$0xff]
          %v1329 = vld [vmem:[#allocation2 + $0xe8] sm:$0xff]
          %v1330 = vld [vmem:[#allocation2 + $0xf0] sm:$0xff]
          %v1331 = vld [vmem:[#allocation2 + $0xf8] sm:$0xff]
          %v1332 = vld [vmem:[#allocation2 + $0x100] sm:$0xff]
          %v1333 = vld [vmem:[#allocation2 + $0x108] sm:$0xff]
          %v1334 = vld [vmem:[#allocation2 + $0x110] sm:$0xff]
          %v1335 = vld [vmem:[#allocation2 + $0x118] sm:$0xff]
          %v1336 = vld [vmem:[#allocation2 + $0x120] sm:$0xff]
          %v1337 = vld [vmem:[#allocation2 + $0x128] sm:$0xff]
          %v1338 = vld [vmem:[#allocation2 + $0x130] sm:$0xff]
          %v1339 = vld [vmem:[#allocation2 + $0x138] sm:$0xff]
          %v1340 = vld [vmem:[#allocation2 + $0x140] sm:$0xff]
          %v1341 = vld [vmem:[#allocation2 + $0x148] sm:$0xff]
          %v1342 = vld [vmem:[#allocation2 + $0x150] sm:$0xff]
          %v1343 = vld [vmem:[#allocation2 + $0x158] sm:$0xff]
          %v1344 = vld [vmem:[#allocation2 + $0x160] sm:$0xff]
          %v1345 = vld [vmem:[#allocation2 + $0x168] sm:$0xff]
          %v1346 = vld [vmem:[#allocation2 + $0x170] sm:$0xff]
          %v1347 = vld [vmem:[#allocation2 + $0x178] sm:$0xff]
          %v1348 = vld [vmem:[#allocation2 + $0x180] sm:$0xff]
          %v1349 = vld [vmem:[#allocation2 + $0x188] sm:$0xff]
          %v1350 = vld [vmem:[#allocation2 + $0x190] sm:$0xff]
          %v1351 = vld [vmem:[#allocation2 + $0x198] sm:$0xff]
          %v1352 = vld [vmem:[#allocation2 + $0x1a0] sm:$0xff]
          %v1353 = vld [vmem:[#allocation2 + $0x1a8] sm:$0xff]
          %v1354 = vld [vmem:[#allocation2 + $0x1b0] sm:$0xff]
          %v1355 = vld [vmem:[#allocation2 + $0x1b8] sm:$0xff]
          %v1356 = vld [vmem:[#allocation2 + $0x1c0] sm:$0xff]
          %v1357 = vld [vmem:[#allocation2 + $0x1c8] sm:$0xff]
          %v1358 = vld [vmem:[#allocation2 + $0x1d0] sm:$0xff]
          %v1359 = vld [vmem:[#allocation2 + $0x1d8] sm:$0xff]
          %v1360 = vld [vmem:[#allocation2 + $0x1e0] sm:$0xff]
          %v1361 = vld [vmem:[#allocation2 + $0x1e8] sm:$0xff]
          %v1362 = vld [vmem:[#allocation2 + $0x1f0] sm:$0xff]
          %v1363 = vld [vmem:[#allocation2 + $0x1f8] sm:$0xff]
          %v1364 = vld [vmem:[#allocation2 + $0x200] sm:$0xff]
          %v1365 = vld [vmem:[#allocation2 + $0x208] sm:$0xff]
          %v1366 = vld [vmem:[#allocation2 + $0x210] sm:$0xff]
          %v1367 = vld [vmem:[#allocation2 + $0x218] sm:$0xff]
          %v1368 = vld [vmem:[#allocation2 + $0x220] sm:$0xff]
          %v1369 = vld [vmem:[#allocation2 + $0x228] sm:$0xff]
          %v1370 = vld [vmem:[#allocation2 + $0x230] sm:$0xff]
          %v1371 = vld [vmem:[#allocation2 + $0x238] sm:$0xff]
          %v1372 = vld [vmem:[#allocation2 + $0x240] sm:$0xff]
          %v1373 = vld [vmem:[#allocation2 + $0x248] sm:$0xff]
          %v1374 = vld [vmem:[#allocation2 + $0x250] sm:$0xff]
          %v1375 = vld [vmem:[#allocation2 + $0x258] sm:$0xff]
          %v1376 = vld [vmem:[#allocation2 + $0x260] sm:$0xff]
          %v1377 = vld [vmem:[#allocation2 + $0x268] sm:$0xff]
          %v1378 = vld [vmem:[#allocation2 + $0x270] sm:$0xff]
          %v1379 = vld [vmem:[#allocation2 + $0x278] sm:$0xff]
          %v1380 = vld [vmem:[#allocation2 + $0x280] sm:$0xff]
          %v1381 = vld [vmem:[#allocation2 + $0x288] sm:$0xff]
          %v1382 = vld [vmem:[#allocation2 + $0x290] sm:$0xff]
          %v1383 = vld [vmem:[#allocation2 + $0x298] sm:$0xff]
          %v1384 = vld [vmem:[#allocation2 + $0x2a0] sm:$0xff]
          %v1385 = vld [vmem:[#allocation2 + $0x2a8] sm:$0xff]
          %v1386 = vld [vmem:[#allocation2 + $0x2b0] sm:$0xff]
          %v1387 = vld [vmem:[#allocation2 + $0x2b8] sm:$0xff]
          %v1388 = vld [vmem:[#allocation2 + $0x2c0] sm:$0xff]
          %v1389 = vld [vmem:[#allocation2 + $0x2c8] sm:$0xff]
          %v1390 = vld [vmem:[#allocation2 + $0x2d0] sm:$0xff]
          %v1391 = vld [vmem:[#allocation2 + $0x2d8] sm:$0xff]
          %v1392 = vld [vmem:[#allocation2 + $0x2e0] sm:$0xff]
          %v1393 = vld [vmem:[#allocation2 + $0x2e8] sm:$0xff]
          %v1394 = vld [vmem:[#allocation2 + $0x2f0] sm:$0xff]
          %v1395 = vld [vmem:[#allocation2 + $0x2f8] sm:$0xff]
          %v1396 = vld [vmem:[#allocation2 + $0x300] sm:$0xff]
          %v1397 = vld [vmem:[#allocation2 + $0x308] sm:$0xff]
          %v1398 = vld [vmem:[#allocation2 + $0x310] sm:$0xff]
          %v1399 = vld [vmem:[#allocation2 + $0x318] sm:$0xff]
          %v1400 = vld [vmem:[#allocation2 + $0x320] sm:$0xff]
          %v1401 = vld [vmem:[#allocation2 + $0x328] sm:$0xff]
          %v1402 = vld [vmem:[#allocation2 + $0x330] sm:$0xff]
          %v1403 = vld [vmem:[#allocation2 + $0x338] sm:$0xff]
          %v1404 = vld [vmem:[#allocation2 + $0x340] sm:$0xff]
          %v1405 = vld [vmem:[#allocation2 + $0x348] sm:$0xff]
          %v1406 = vld [vmem:[#allocation2 + $0x350] sm:$0xff]
          %v1407 = vld [vmem:[#allocation2 + $0x358] sm:$0xff]
          %v1408 = vld [vmem:[#allocation2 + $0x360] sm:$0xff]
          %v1409 = vld [vmem:[#allocation2 + $0x368] sm:$0xff]
          %v1410 = vld [vmem:[#allocation2 + $0x370] sm:$0xff]
          %v1411 = vld [vmem:[#allocation2 + $0x378] sm:$0xff]
          %v1412 = vld [vmem:[#allocation2 + $0x380] sm:$0xff]
          %v1413 = vld [vmem:[#allocation2 + $0x388] sm:$0xff]
          %v1414 = vld [vmem:[#allocation2 + $0x390] sm:$0xff]
          %v1415 = vld [vmem:[#allocation2 + $0x398] sm:$0xff]
          %v1416 = vld [vmem:[#allocation2 + $0x3a0] sm:$0xff]
          %v1417 = vld [vmem:[#allocation2 + $0x3a8] sm:$0xff]
          %v1418 = vld [vmem:[#allocation2 + $0x3b0] sm:$0xff]
          %v1419 = vld [vmem:[#allocation2 + $0x3b8] sm:$0xff]
          %v1420 = vld [vmem:[#allocation2 + $0x3c0] sm:$0xff]
          %v1421 = vld [vmem:[#allocation2 + $0x3c8] sm:$0xff]
          %v1422 = vld [vmem:[#allocation2 + $0x3d0] sm:$0xff]
          %v1423 = vld [vmem:[#allocation2 + $0x3d8] sm:$0xff]
          %v1424 = vld [vmem:[#allocation2 + $0x3e0] sm:$0xff]
          %v1425 = vld [vmem:[#allocation2 + $0x3e8] sm:$0xff]
          %v1426 = vld [vmem:[#allocation2 + $0x3f0] sm:$0xff]
          %v1427 = vld [vmem:[#allocation2 + $0x3f8] sm:$0xff]
          %1428 = vst [vmem:[%s230] sm:$0xff] %v1300
          %1429 = vst [vmem:[%s230 + $0x8] sm:$0xff] %v1301
          %1430 = vst [vmem:[%s230 + $0x10] sm:$0xff] %v1302
          %1431 = vst [vmem:[%s230 + $0x18] sm:$0xff] %v1303
          %1432 = vst [vmem:[%s230 + $0x20] sm:$0xff] %v1304
          %1433 = vst [vmem:[%s230 + $0x28] sm:$0xff] %v1305
          %1434 = vst [vmem:[%s230 + $0x30] sm:$0xff] %v1306
          %1435 = vst [vmem:[%s230 + $0x38] sm:$0xff] %v1307
          %1436 = vst [vmem:[%s230 + $0x40] sm:$0xff] %v1308
          %1437 = vst [vmem:[%s230 + $0x48] sm:$0xff] %v1309
          %1438 = vst [vmem:[%s230 + $0x50] sm:$0xff] %v1310
          %1439 = vst [vmem:[%s230 + $0x58] sm:$0xff] %v1311
          %1440 = vst [vmem:[%s230 + $0x60] sm:$0xff] %v1312
          %1441 = vst [vmem:[%s230 + $0x68] sm:$0xff] %v1313
          %1442 = vst [vmem:[%s230 + $0x70] sm:$0xff] %v1314
          %1443 = vst [vmem:[%s230 + $0x78] sm:$0xff] %v1315
          %1444 = vst [vmem:[%s230 + $0x80] sm:$0xff] %v1316
          %1445 = vst [vmem:[%s230 + $0x88] sm:$0xff] %v1317
          %1446 = vst [vmem:[%s230 + $0x90] sm:$0xff] %v1318
          %1447 = vst [vmem:[%s230 + $0x98] sm:$0xff] %v1319
          %1448 = vst [vmem:[%s230 + $0xa0] sm:$0xff] %v1320
          %1449 = vst [vmem:[%s230 + $0xa8] sm:$0xff] %v1321
          %1450 = vst [vmem:[%s230 + $0xb0] sm:$0xff] %v1322
          %1451 = vst [vmem:[%s230 + $0xb8] sm:$0xff] %v1323
          %1452 = vst [vmem:[%s230 + $0xc0] sm:$0xff] %v1324
          %1453 = vst [vmem:[%s230 + $0xc8] sm:$0xff] %v1325
          %1454 = vst [vmem:[%s230 + $0xd0] sm:$0xff] %v1326
          %1455 = vst [vmem:[%s230 + $0xd8] sm:$0xff] %v1327
          %1456 = vst [vmem:[%s230 + $0xe0] sm:$0xff] %v1328
          %1457 = vst [vmem:[%s230 + $0xe8] sm:$0xff] %v1329
          %1458 = vst [vmem:[%s230 + $0xf0] sm:$0xff] %v1330
          %1459 = vst [vmem:[%s230 + $0xf8] sm:$0xff] %v1331
          %1460 = vst [vmem:[%s230 + $0x100] sm:$0xff] %v1332
          %1461 = vst [vmem:[%s230 + $0x108] sm:$0xff] %v1333
          %1462 = vst [vmem:[%s230 + $0x110] sm:$0xff] %v1334
          %1463 = vst [vmem:[%s230 + $0x118] sm:$0xff] %v1335
          %1464 = vst [vmem:[%s230 + $0x120] sm:$0xff] %v1336
          %1465 = vst [vmem:[%s230 + $0x128] sm:$0xff] %v1337
          %1466 = vst [vmem:[%s230 + $0x130] sm:$0xff] %v1338
          %1467 = vst [vmem:[%s230 + $0x138] sm:$0xff] %v1339
          %1468 = vst [vmem:[%s230 + $0x140] sm:$0xff] %v1340
          %1469 = vst [vmem:[%s230 + $0x148] sm:$0xff] %v1341
          %1470 = vst [vmem:[%s230 + $0x150] sm:$0xff] %v1342
          %1471 = vst [vmem:[%s230 + $0x158] sm:$0xff] %v1343
          %1472 = vst [vmem:[%s230 + $0x160] sm:$0xff] %v1344
          %1473 = vst [vmem:[%s230 + $0x168] sm:$0xff] %v1345
          %1474 = vst [vmem:[%s230 + $0x170] sm:$0xff] %v1346
          %1475 = vst [vmem:[%s230 + $0x178] sm:$0xff] %v1347
          %1476 = vst [vmem:[%s230 + $0x180] sm:$0xff] %v1348
          %1477 = vst [vmem:[%s230 + $0x188] sm:$0xff] %v1349
          %1478 = vst [vmem:[%s230 + $0x190] sm:$0xff] %v1350
          %1479 = vst [vmem:[%s230 + $0x198] sm:$0xff] %v1351
          %1480 = vst [vmem:[%s230 + $0x1a0] sm:$0xff] %v1352
          %1481 = vst [vmem:[%s230 + $0x1a8] sm:$0xff] %v1353
          %1482 = vst [vmem:[%s230 + $0x1b0] sm:$0xff] %v1354
          %1483 = vst [vmem:[%s230 + $0x1b8] sm:$0xff] %v1355
          %1484 = vst [vmem:[%s230 + $0x1c0] sm:$0xff] %v1356
          %1485 = vst [vmem:[%s230 + $0x1c8] sm:$0xff] %v1357
          %1486 = vst [vmem:[%s230 + $0x1d0] sm:$0xff] %v1358
          %1487 = vst [vmem:[%s230 + $0x1d8] sm:$0xff] %v1359
          %1488 = vst [vmem:[%s230 + $0x1e0] sm:$0xff] %v1360
          %1489 = vst [vmem:[%s230 + $0x1e8] sm:$0xff] %v1361
          %1490 = vst [vmem:[%s230 + $0x1f0] sm:$0xff] %v1362
          %1491 = vst [vmem:[%s230 + $0x1f8] sm:$0xff] %v1363
          %1492 = vst [vmem:[%s230 + $0x200] sm:$0xff] %v1364
          %1493 = vst [vmem:[%s230 + $0x208] sm:$0xff] %v1365
          %1494 = vst [vmem:[%s230 + $0x210] sm:$0xff] %v1366
          %1495 = vst [vmem:[%s230 + $0x218] sm:$0xff] %v1367
          %1496 = vst [vmem:[%s230 + $0x220] sm:$0xff] %v1368
          %1497 = vst [vmem:[%s230 + $0x228] sm:$0xff] %v1369
          %1498 = vst [vmem:[%s230 + $0x230] sm:$0xff] %v1370
          %1499 = vst [vmem:[%s230 + $0x238] sm:$0xff] %v1371
          %1500 = vst [vmem:[%s230 + $0x240] sm:$0xff] %v1372
          %1501 = vst [vmem:[%s230 + $0x248] sm:$0xff] %v1373
          %1502 = vst [vmem:[%s230 + $0x250] sm:$0xff] %v1374
          %1503 = vst [vmem:[%s230 + $0x258] sm:$0xff] %v1375
          %1504 = vst [vmem:[%s230 + $0x260] sm:$0xff] %v1376
          %1505 = vst [vmem:[%s230 + $0x268] sm:$0xff] %v1377
          %1506 = vst [vmem:[%s230 + $0x270] sm:$0xff] %v1378
          %1507 = vst [vmem:[%s230 + $0x278] sm:$0xff] %v1379
          %1508 = vst [vmem:[%s230 + $0x280] sm:$0xff] %v1380
          %1509 = vst [vmem:[%s230 + $0x288] sm:$0xff] %v1381
          %1510 = vst [vmem:[%s230 + $0x290] sm:$0xff] %v1382
          %1511 = vst [vmem:[%s230 + $0x298] sm:$0xff] %v1383
          %1512 = vst [vmem:[%s230 + $0x2a0] sm:$0xff] %v1384
          %1513 = vst [vmem:[%s230 + $0x2a8] sm:$0xff] %v1385
          %1514 = vst [vmem:[%s230 + $0x2b0] sm:$0xff] %v1386
          %1515 = vst [vmem:[%s230 + $0x2b8] sm:$0xff] %v1387
          %1516 = vst [vmem:[%s230 + $0x2c0] sm:$0xff] %v1388
          %1517 = vst [vmem:[%s230 + $0x2c8] sm:$0xff] %v1389
          %1518 = vst [vmem:[%s230 + $0x2d0] sm:$0xff] %v1390
          %1519 = vst [vmem:[%s230 + $0x2d8] sm:$0xff] %v1391
          %1520 = vst [vmem:[%s230 + $0x2e0] sm:$0xff] %v1392
          %1521 = vst [vmem:[%s230 + $0x2e8] sm:$0xff] %v1393
          %1522 = vst [vmem:[%s230 + $0x2f0] sm:$0xff] %v1394
          %1523 = vst [vmem:[%s230 + $0x2f8] sm:$0xff] %v1395
          %1524 = vst [vmem:[%s230 + $0x300] sm:$0xff] %v1396
          %1525 = vst [vmem:[%s230 + $0x308] sm:$0xff] %v1397
          %1526 = vst [vmem:[%s230 + $0x310] sm:$0xff] %v1398
          %1527 = vst [vmem:[%s230 + $0x318] sm:$0xff] %v1399
          %1528 = vst [vmem:[%s230 + $0x320] sm:$0xff] %v1400
          %1529 = vst [vmem:[%s230 + $0x328] sm:$0xff] %v1401
          %1530 = vst [vmem:[%s230 + $0x330] sm:$0xff] %v1402
          %1531 = vst [vmem:[%s230 + $0x338] sm:$0xff] %v1403
          %1532 = vst [vmem:[%s230 + $0x340] sm:$0xff] %v1404
          %1533 = vst [vmem:[%s230 + $0x348] sm:$0xff] %v1405
          %1534 = vst [vmem:[%s230 + $0x350] sm:$0xff] %v1406
          %1535 = vst [vmem:[%s230 + $0x358] sm:$0xff] %v1407
          %1536 = vst [vmem:[%s230 + $0x360] sm:$0xff] %v1408
          %1537 = vst [vmem:[%s230 + $0x368] sm:$0xff] %v1409
          %1538 = vst [vmem:[%s230 + $0x370] sm:$0xff] %v1410
          %1539 = vst [vmem:[%s230 + $0x378] sm:$0xff] %v1411
          %1540 = vst [vmem:[%s230 + $0x380] sm:$0xff] %v1412
          %1541 = vst [vmem:[%s230 + $0x388] sm:$0xff] %v1413
          %1542 = vst [vmem:[%s230 + $0x390] sm:$0xff] %v1414
          %1543 = vst [vmem:[%s230 + $0x398] sm:$0xff] %v1415
          %1544 = vst [vmem:[%s230 + $0x3a0] sm:$0xff] %v1416
          %1545 = vst [vmem:[%s230 + $0x3a8] sm:$0xff] %v1417
          %1546 = vst [vmem:[%s230 + $0x3b0] sm:$0xff] %v1418
          %1547 = vst [vmem:[%s230 + $0x3b8] sm:$0xff] %v1419
          %1548 = vst [vmem:[%s230 + $0x3c0] sm:$0xff] %v1420
          %1549 = vst [vmem:[%s230 + $0x3c8] sm:$0xff] %v1421
          %1550 = vst [vmem:[%s230 + $0x3d0] sm:$0xff] %v1422
          %1551 = vst [vmem:[%s230 + $0x3d8] sm:$0xff] %v1423
          %1552 = vst [vmem:[%s230 + $0x3e0] sm:$0xff] %v1424
          %1553 = vst [vmem:[%s230 + $0x3e8] sm:$0xff] %v1425
          %1554 = vst [vmem:[%s230 + $0x3f0] sm:$0xff] %v1426
          %1555 = vst [vmem:[%s230 + $0x3f8] sm:$0xff] %v1427
        $region44: #{tpu_custom_call.1} parent=27 // pred_fallthru
          _
        %s1556 = sand.u32 %s107, 1
        %s1557 = scalar_lea.sflag [#allocation5], %s1556
        %s1558 = sand.u32 %s107, 1
        %s1559 = smul.addr %s1558, 1024
        %s1560 = scalar_lea.vmem [#allocation8], %s1559
        // Predicated region
        $region45: #{tpu_custom_call.1} parent=27 // pred_check
          %p1561 = pneg %p117
        $region46: #{tpu_custom_call.1} parent=27 // pred_check_branch
          %1563 = sbr.rel (%p1561) target = $region48
        $region47: #{tpu_custom_call.1} parent=27 // pred_region
          %s1564 = smul.u32 64, %s27
          %s1565 = smul.u32 2, %s28
          %s1567 = ssub.s32 16384, 16384
          %1568 = vsyncadd %s1557, %s1567
          %s1569 = smul.addr %s1564, 6
          %s1570 = sadd.s32 %s1565, %s1569
          %s1571 = smul.addr %s1570, 128
          %s1572 = scalar_lea.hbm %s2, %s1571
          %s1573 = sshll.u32 %s1560, 4
          %s1574 = int_to_ptr.vmem [resolvable:$true] %s1573
          %1579 = dma.vmem_to_hbm [thread:$0]  %s1574, 16384, %s1572, %s1557, 256, 768, 16
        $region48: #{tpu_custom_call.1} parent=27 // pred_fallthru
          _
      $region28: #{tpu_custom_call.1} parent=5 // pred_fallthru
        _
      %p1580 = scmp.le.s32.totalorder 2, %s17
      // Predicated region
      $region49: #{tpu_custom_call.1} parent=5 // pred_check
        %p1581 = pneg %p1580
      $region50: #{tpu_custom_call.1} parent=5 // pred_check_branch
        %1583 = sbr.rel (%p1581) target = $region52
      $region51: #{tpu_custom_call.1} parent=5 // pred_region
        %s1584 = ssub.s32 %s17, 2
        // Predicated region
        $region53: #{tpu_custom_call.1} parent=51 // pred_check
          %p1585 = pneg %p123
        $region54: #{tpu_custom_call.1} parent=51 // pred_check_branch
          %1587 = sbr.rel (%p1585) target = $region56
        $region55: #{tpu_custom_call.1} parent=51 // pred_region
          %s1588 = sand.u32 %s108, 1
          %s1589 = scalar_lea.sflag [#allocation5], %s1588
          %s1590 = sand.u32 %s108, 1
          %s1591 = smul.addr %s1590, 1024
          %s1592 = scalar_lea.vmem [#allocation8], %s1591
          %1593 = dma.done %s1589, 16384
        $region56: #{tpu_custom_call.1} parent=51 // pred_fallthru
          _
      $region52: #{tpu_custom_call.1} parent=5 // pred_fallthru
        _
    $region6: #{tpu_custom_call.1} parent=1 // loop_footer
      %s21 = sadd.s32 1, %s17
    $region7: #{tpu_custom_call.1} parent=1 // loop_footer_branch
      %16 = sbr.rel target = $region3
    $region8: #{tpu_custom_call.1} parent=1 // loop_exit
      _
    %1594 = vsyncpa [#allocation4], 1
    %s1595 = scalar_lea.sflag [#allocation4], 1
    %1596 = vsyncpa %s1595, 1
    %1597 = vsyncpa [#allocation7], 1
    %s1598 = scalar_lea.sflag [#allocation7], 1
    %1599 = vsyncpa %s1598, 1
    %1600 = vsyncpa [#allocation5], 1
    %s1601 = scalar_lea.sflag [#allocation5], 1
    %1602 = vsyncpa %s1601, 1

</llo_original>
